<compile_context>
chip_gen: v6e
topology: v6e:2x2x1
jax: 0.10.0
libtpu: 0.0.40
codegen_flags: <defaults>
</compile_context>

<pallas_src>
import jax
import jax.numpy as jnp
from jax.experimental import pallas as pl
from jax.experimental.pallas import tpu as pltpu

# ---------------- configuration (small, consistent with the module) ----------
B, N, D = 2, 8, 32          # batch, seq, hidden dim
H = 4                       # num_heads
KVH = 2                     # num_kv_heads (GQA)
HD = D // H                 # head_dim = 8
I = int(D * 4.0)            # intermediate_size = 128 (mlp_ratio=4.0)
EPS = 1e-6
SCALE = float(HD) ** -0.5   # qk_scale=None -> head_dim**-0.5
GAMMA_INIT = 1e-5           # layer_scale_init_values

QW = H * HD                 # 32  (query width)
KW = KVH * HD               # 16  (key width)
QKW = QW + KW               # 48  (fused q|k width, head-RMSNorm applied jointly)


def _rms(x, w):
    """RMSNorm over the last axis. x: (T, D), w: (1, D)."""
    var = jnp.mean(x * x, axis=-1, keepdims=True)
    return x * jax.lax.rsqrt(var + EPS) * w


# ---------------------------- the fused kernel --------------------------------
def encoder_block_kernel(x_ref, bias_ref, ln1_ref, wqkv_ref, pool_ref, wqk_ref,
                         wo_ref, gsa_ref, ln2_ref, wgu_ref, wd_ref, y_ref):
    x = x_ref[...]                                         # (BN, D) f32
    h = _rms(x, ln1_ref[...])                              # input_layernorm

    # ---- fused QKV projection: one lane-dense MXU push instead of three ----
    qkv = jnp.dot(h, wqkv_ref[...], preferred_element_type=jnp.float32)  # (BN, 64)
    qk = qkv[:, :QKW]                                      # (BN, 48) = q|k
    v = qkv[:, QKW:]                                       # (BN, 16)

    # ---- vectorized per-head q/k RMSNorm via block-pooling matmul ----
    # pool is block-diag(kron(I_{H+KVH}, ones(HD,HD)/HD)): gives every column its
    # own head's mean-square, already broadcast; one rsqrt pass for all heads.
    ms = jnp.dot(qk * qk, pool_ref[...], preferred_element_type=jnp.float32)
    qk = qk * jax.lax.rsqrt(ms + EPS) * wqk_ref[...]       # wqk = per-head norm weights tiled

    # ---- GQA attention (tiny head count, unrolled); block-diagonal bias keeps
    #      each batch element attending only to itself ----
    bias = bias_ref[...]                                   # (BN, BN)
    rep = H // KVH
    o_heads = []
    for hh in range(H):
        g = hh // rep
        qh = qk[:, hh * HD:(hh + 1) * HD]                  # (BN, HD)
        kh = qk[:, QW + g * HD:QW + (g + 1) * HD]          # (BN, HD)
        vh = v[:, g * HD:(g + 1) * HD]                     # (BN, HD)
        s = jax.lax.dot_general(qh, kh, (((1,), (1,)), ((), ())),
                                preferred_element_type=jnp.float32) * SCALE + bias
        s = s - jnp.max(s, axis=-1, keepdims=True)
        p = jnp.exp(s)
        p = p * pl.reciprocal(jnp.sum(p, axis=-1, keepdims=True), approx=True)
        o_heads.append(jnp.dot(p, vh, preferred_element_type=jnp.float32))
    o_cat = jnp.concatenate(o_heads, axis=1)               # (BN, H*HD)
    attn = jnp.dot(o_cat, wo_ref[...], preferred_element_type=jnp.float32)  # single out-proj

    h1 = x + gsa_ref[...] * attn                           # residual + gamma_sa * attn
    h2 = _rms(h1, ln2_ref[...])                            # post_attention_layernorm

    # ---- SwiGLU MLP: fused gate|up projection -> 2 matmuls total ----
    gu = jnp.dot(h2, wgu_ref[...], preferred_element_type=jnp.float32)     # (BN, 2I)
    a = jax.nn.silu(gu[:, :I]) * gu[:, I:]                                 # (BN, I)
    mlp = jnp.dot(a, wd_ref[...], preferred_element_type=jnp.float32)      # (BN, D)

    # forward() adds the MLP branch without gamma_ffn / drop_path_ffn.
    y_ref[...] = h1 + mlp


# ------------------------------ host wrapper ----------------------------------
def encoder_block(x, params):
    (ln1, wq, wk, wv, qn, kn, wo, gsa, ln2, wg, wu, wd) = params
    Bb, Nn, Dd = x.shape
    BN = Bb * Nn

    # --- one-time host-side weight fusion / preprocessing (free vs. the kernel) ---
    w_qkv = jnp.concatenate([wq, wk, wv], axis=1)                       # (D, 64)
    w_gu = jnp.concatenate([wg, wu], axis=1)                            # (D, 2I)
    pool = jnp.kron(jnp.eye(H + KVH, dtype=jnp.float32),
                    jnp.full((HD, HD), 1.0 / HD, jnp.float32))          # (48, 48)
    w_qk = jnp.concatenate([jnp.tile(qn, H), jnp.tile(kn, KVH)])[None, :]  # (1, 48)
    # block-diagonal additive softmax bias: token attends only within its batch element
    bid = jnp.arange(BN, dtype=jnp.int32) // Nn
    attn_bias = jnp.where(bid[:, None] == bid[None, :], 0.0, -1e30).astype(jnp.float32)

    x2 = x.reshape(BN, Dd)
    vmem = pl.BlockSpec(memory_space=pltpu.MemorySpace.VMEM)

    y2 = pl.pallas_call(
        encoder_block_kernel,
        out_shape=jax.ShapeDtypeStruct((BN, Dd), jnp.float32),
        in_specs=[vmem] * 11,
        out_specs=vmem,
    )(x2, attn_bias, ln1[None, :], w_qkv, pool, w_qk, wo, gsa[None, :],
      ln2[None, :], w_gu, wd)

    return y2.reshape(Bb, Nn, Dd)


# ---------------------------- parameter init ----------------------------------
def init_params(key):
    ks = jax.random.split(key, 11)
    s = 0.05
    # mildly perturbed norm weights so the per-head weight tiling is actually tested
    ln1 = 1.0 + 0.1 * jax.random.normal(ks[0], (D,), jnp.float32)
    ln2 = 1.0 + 0.1 * jax.random.normal(ks[1], (D,), jnp.float32)
    qn = 1.0 + 0.1 * jax.random.normal(ks[2], (HD,), jnp.float32)
    kn = 1.0 + 0.1 * jax.random.normal(ks[3], (HD,), jnp.float32)
    wq = jax.random.normal(ks[4], (D, H * HD), jnp.float32) * s
    wk = jax.random.normal(ks[5], (D, KVH * HD), jnp.float32) * s
    wv = jax.random.normal(ks[6], (D, KVH * HD), jnp.float32) * s
    wo = jax.random.normal(ks[7], (H * HD, D), jnp.float32) * s
    gsa = GAMMA_INIT * jnp.ones((D,), jnp.float32)
    wg = jax.random.normal(ks[8], (D, I), jnp.float32) * s
    wu = jax.random.normal(ks[9], (D, I), jnp.float32) * s
    wd = jax.random.normal(ks[10], (I, D), jnp.float32) * s
    return (ln1, wq, wk, wv, qn, kn, wo, gsa, ln2, wg, wu, wd)


# ------------------------- pure-JAX reference ----------------------------------
def reference(x, params):
    (ln1, wq, wk, wv, qn, kn, wo, gsa, ln2, wg, wu, wd) = params

    def rms(v, w):
        return v * jax.lax.rsqrt(jnp.mean(v * v, -1, keepdims=True) + EPS) * w

    h = rms(x, ln1)                                        # input_layernorm
    q = (h @ wq).reshape(B, N, H, HD)
    k = (h @ wk).reshape(B, N, KVH, HD)
    vv = (h @ wv).reshape(B, N, KVH, HD)
    q = rms(q, qn)                                         # per-head q norm
    k = rms(k, kn)                                         # per-head k norm
    rep = H // KVH
    kf = jnp.repeat(k, rep, axis=2)
    vf = jnp.repeat(vv, rep, axis=2)
    s = jnp.einsum('bqhd,bkhd->bhqk', q, kf) * SCALE
    p = jax.nn.softmax(s, axis=-1)
    o = jnp.einsum('bhqk,bkhd->bqhd', p, vf).reshape(B, N, H * HD)
    h1 = x + gsa * (o @ wo)                                # residual + gamma_sa * attn
    h2 = rms(h1, ln2)                                      # post_attention_layernorm
    mlp = (jax.nn.silu(h2 @ wg) * (h2 @ wu)) @ wd          # SwiGLU Mlp
    return h1 + mlp                                        # forward adds without gamma_ffn


if __name__ == "__main__":
    key = jax.random.PRNGKey(0)
    kx, kp = jax.random.split(key)
    x = jax.random.normal(kx, (B, N, D), jnp.float32)
    params = init_params(kp)

    y = encoder_block(x, params)
    jax.block_until_ready(y)

    y_ref = reference(x, params)
    max_err = float(jnp.max(jnp.abs(y - y_ref)))
    assert jnp.allclose(y, y_ref, atol=2e-2, rtol=2e-2), max_err

    print("KERNEL_OK")
</pallas_src>

<mosaic_0001>
module attributes {stable_mosaic.version = 11 : i64} {
  func.func @encoder_block_kernel(%arg0: memref<16x32xf32, #tpu.memory_space<vmem>>, %arg1: memref<16x16xf32, #tpu.memory_space<vmem>>, %arg2: memref<1x32xf32, #tpu.memory_space<vmem>>, %arg3: memref<32x64xf32, #tpu.memory_space<vmem>>, %arg4: memref<48x48xf32, #tpu.memory_space<vmem>>, %arg5: memref<1x48xf32, #tpu.memory_space<vmem>>, %arg6: memref<32x32xf32, #tpu.memory_space<vmem>>, %arg7: memref<1x32xf32, #tpu.memory_space<vmem>>, %arg8: memref<1x32xf32, #tpu.memory_space<vmem>>, %arg9: memref<32x256xf32, #tpu.memory_space<vmem>>, %arg10: memref<128x32xf32, #tpu.memory_space<vmem>>, %arg11: memref<16x32xf32, #tpu.memory_space<vmem>>) attributes {dimension_semantics = [], scalar_prefetch = 0 : i64, scratch_operands = 0 : i64, tpu.core_type = #tpu.core_type<tc>} {
    %c0 = arith.constant 0 : index
    %c0_0 = arith.constant 0 : index
    %0 = vector.load %arg0[%c0, %c0_0] : memref<16x32xf32, #tpu.memory_space<vmem>>, vector<16x32xf32>
    %c0_1 = arith.constant 0 : index
    %c0_2 = arith.constant 0 : index
    %1 = vector.load %arg2[%c0_1, %c0_2] : memref<1x32xf32, #tpu.memory_space<vmem>>, vector<1x32xf32>
    %2 = arith.mulf %0, %0 : vector<16x32xf32>
    %cst = arith.constant dense<0.000000e+00> : vector<16xf32>
    %3 = vector.multi_reduction <add>, %2, %cst [1] : vector<16x32xf32> to vector<16xf32>
    %4 = vector.shape_cast %3 : vector<16xf32> to vector<16x1xf32>
    %cst_3 = arith.constant 3.200000e+01 : f32
    %5 = vector.broadcast %cst_3 : f32 to vector<16x1xf32>
    %6 = arith.divf %4, %5 : vector<16x1xf32>
    %cst_4 = arith.constant 9.99999997E-7 : f32
    %7 = vector.broadcast %cst_4 : f32 to vector<16x1xf32>
    %8 = arith.addf %6, %7 : vector<16x1xf32>
    %9 = math.rsqrt %8 : vector<16x1xf32>
    %10 = vector.broadcast %9 : vector<16x1xf32> to vector<16x32xf32>
    %11 = arith.mulf %0, %10 : vector<16x32xf32>
    %12 = vector.broadcast %1 : vector<1x32xf32> to vector<16x32xf32>
    %13 = arith.mulf %11, %12 : vector<16x32xf32>
    %c0_5 = arith.constant 0 : index
    %c0_6 = arith.constant 0 : index
    %14 = vector.load %arg3[%c0_5, %c0_6] : memref<32x64xf32, #tpu.memory_space<vmem>>, vector<32x64xf32>
    %cst_7 = arith.constant dense<0.000000e+00> : vector<16x64xf32>
    %15 = tpu.matmul %13, %14, %cst_7 {dimension_numbers = #tpu.dot_dimension_numbers<[1], [0], [0], [1], [0, 0, 1, 1], [], []>} : vector<16x32xf32>, vector<32x64xf32>, vector<16x64xf32> -> vector<16x64xf32>
    %16 = vector.extract_strided_slice %15 {offsets = [0, 0], sizes = [16, 48], strides = [1, 1]} : vector<16x64xf32> to vector<16x48xf32>
    %17 = vector.extract_strided_slice %15 {offsets = [0, 48], sizes = [16, 16], strides = [1, 1]} : vector<16x64xf32> to vector<16x16xf32>
    %18 = arith.mulf %16, %16 : vector<16x48xf32>
    %c0_8 = arith.constant 0 : index
    %c0_9 = arith.constant 0 : index
    %19 = vector.load %arg4[%c0_8, %c0_9] : memref<48x48xf32, #tpu.memory_space<vmem>>, vector<48x48xf32>
    %cst_10 = arith.constant dense<0.000000e+00> : vector<16x48xf32>
    %20 = tpu.matmul %18, %19, %cst_10 {dimension_numbers = #tpu.dot_dimension_numbers<[1], [0], [0], [1], [0, 0, 1, 1], [], []>} : vector<16x48xf32>, vector<48x48xf32>, vector<16x48xf32> -> vector<16x48xf32>
    %cst_11 = arith.constant 9.99999997E-7 : f32
    %21 = vector.broadcast %cst_11 : f32 to vector<16x48xf32>
    %22 = arith.addf %20, %21 : vector<16x48xf32>
    %23 = math.rsqrt %22 : vector<16x48xf32>
    %24 = arith.mulf %16, %23 : vector<16x48xf32>
    %c0_12 = arith.constant 0 : index
    %c0_13 = arith.constant 0 : index
    %25 = vector.load %arg5[%c0_12, %c0_13] : memref<1x48xf32, #tpu.memory_space<vmem>>, vector<1x48xf32>
    %26 = vector.broadcast %25 : vector<1x48xf32> to vector<16x48xf32>
    %27 = arith.mulf %24, %26 : vector<16x48xf32>
    %c0_14 = arith.constant 0 : index
    %c0_15 = arith.constant 0 : index
    %28 = vector.load %arg1[%c0_14, %c0_15] : memref<16x16xf32, #tpu.memory_space<vmem>>, vector<16x16xf32>
    %29 = vector.extract_strided_slice %27 {offsets = [0, 0], sizes = [16, 8], strides = [1, 1]} : vector<16x48xf32> to vector<16x8xf32>
    %30 = vector.extract_strided_slice %27 {offsets = [0, 32], sizes = [16, 8], strides = [1, 1]} : vector<16x48xf32> to vector<16x8xf32>
    %31 = vector.extract_strided_slice %17 {offsets = [0, 0], sizes = [16, 8], strides = [1, 1]} : vector<16x16xf32> to vector<16x8xf32>
    %cst_16 = arith.constant dense<0.000000e+00> : vector<16x16xf32>
    %32 = tpu.matmul %29, %30, %cst_16 {dimension_numbers = #tpu.dot_dimension_numbers<[1], [1], [0], [0], [0, 0, 1, 0], [], []>} : vector<16x8xf32>, vector<16x8xf32>, vector<16x16xf32> -> vector<16x16xf32>
    %cst_17 = arith.constant 0.353553385 : f32
    %33 = vector.broadcast %cst_17 : f32 to vector<16x16xf32>
    %34 = arith.mulf %32, %33 : vector<16x16xf32>
    %35 = arith.addf %34, %28 : vector<16x16xf32>
    %cst_18 = arith.constant dense<0xFF800000> : vector<16xf32>
    %36 = vector.multi_reduction <maximumf>, %35, %cst_18 [1] : vector<16x16xf32> to vector<16xf32>
    %37 = vector.shape_cast %36 : vector<16xf32> to vector<16x1xf32>
    %38 = vector.broadcast %37 : vector<16x1xf32> to vector<16x16xf32>
    %39 = arith.subf %35, %38 : vector<16x16xf32>
    %40 = math.exp %39 : vector<16x16xf32>
    %cst_19 = arith.constant dense<0.000000e+00> : vector<16xf32>
    %41 = vector.multi_reduction <add>, %40, %cst_19 [1] : vector<16x16xf32> to vector<16xf32>
    %42 = vector.shape_cast %41 : vector<16xf32> to vector<16x1xf32>
    %43 = tpu.reciprocal %42 {approx = true} : vector<16x1xf32> -> vector<16x1xf32>
    %44 = vector.broadcast %43 : vector<16x1xf32> to vector<16x16xf32>
    %45 = arith.mulf %40, %44 : vector<16x16xf32>
    %cst_20 = arith.constant dense<0.000000e+00> : vector<16x8xf32>
    %46 = tpu.matmul %45, %31, %cst_20 {dimension_numbers = #tpu.dot_dimension_numbers<[1], [0], [0], [1], [0, 0, 1, 1], [], []>} : vector<16x16xf32>, vector<16x8xf32>, vector<16x8xf32> -> vector<16x8xf32>
    %47 = vector.extract_strided_slice %27 {offsets = [0, 8], sizes = [16, 8], strides = [1, 1]} : vector<16x48xf32> to vector<16x8xf32>
    %48 = vector.extract_strided_slice %27 {offsets = [0, 32], sizes = [16, 8], strides = [1, 1]} : vector<16x48xf32> to vector<16x8xf32>
    %49 = vector.extract_strided_slice %17 {offsets = [0, 0], sizes = [16, 8], strides = [1, 1]} : vector<16x16xf32> to vector<16x8xf32>
    %cst_21 = arith.constant dense<0.000000e+00> : vector<16x16xf32>
    %50 = tpu.matmul %47, %48, %cst_21 {dimension_numbers = #tpu.dot_dimension_numbers<[1], [1], [0], [0], [0, 0, 1, 0], [], []>} : vector<16x8xf32>, vector<16x8xf32>, vector<16x16xf32> -> vector<16x16xf32>
    %cst_22 = arith.constant 0.353553385 : f32
    %51 = vector.broadcast %cst_22 : f32 to vector<16x16xf32>
    %52 = arith.mulf %50, %51 : vector<16x16xf32>
    %53 = arith.addf %52, %28 : vector<16x16xf32>
    %cst_23 = arith.constant dense<0xFF800000> : vector<16xf32>
    %54 = vector.multi_reduction <maximumf>, %53, %cst_23 [1] : vector<16x16xf32> to vector<16xf32>
    %55 = vector.shape_cast %54 : vector<16xf32> to vector<16x1xf32>
    %56 = vector.broadcast %55 : vector<16x1xf32> to vector<16x16xf32>
    %57 = arith.subf %53, %56 : vector<16x16xf32>
    %58 = math.exp %57 : vector<16x16xf32>
    %cst_24 = arith.constant dense<0.000000e+00> : vector<16xf32>
    %59 = vector.multi_reduction <add>, %58, %cst_24 [1] : vector<16x16xf32> to vector<16xf32>
    %60 = vector.shape_cast %59 : vector<16xf32> to vector<16x1xf32>
    %61 = tpu.reciprocal %60 {approx = true} : vector<16x1xf32> -> vector<16x1xf32>
    %62 = vector.broadcast %61 : vector<16x1xf32> to vector<16x16xf32>
    %63 = arith.mulf %58, %62 : vector<16x16xf32>
    %cst_25 = arith.constant dense<0.000000e+00> : vector<16x8xf32>
    %64 = tpu.matmul %63, %49, %cst_25 {dimension_numbers = #tpu.dot_dimension_numbers<[1], [0], [0], [1], [0, 0, 1, 1], [], []>} : vector<16x16xf32>, vector<16x8xf32>, vector<16x8xf32> -> vector<16x8xf32>
    %65 = vector.extract_strided_slice %27 {offsets = [0, 16], sizes = [16, 8], strides = [1, 1]} : vector<16x48xf32> to vector<16x8xf32>
    %66 = vector.extract_strided_slice %27 {offsets = [0, 40], sizes = [16, 8], strides = [1, 1]} : vector<16x48xf32> to vector<16x8xf32>
    %67 = vector.extract_strided_slice %17 {offsets = [0, 8], sizes = [16, 8], strides = [1, 1]} : vector<16x16xf32> to vector<16x8xf32>
    %cst_26 = arith.constant dense<0.000000e+00> : vector<16x16xf32>
    %68 = tpu.matmul %65, %66, %cst_26 {dimension_numbers = #tpu.dot_dimension_numbers<[1], [1], [0], [0], [0, 0, 1, 0], [], []>} : vector<16x8xf32>, vector<16x8xf32>, vector<16x16xf32> -> vector<16x16xf32>
    %cst_27 = arith.constant 0.353553385 : f32
    %69 = vector.broadcast %cst_27 : f32 to vector<16x16xf32>
    %70 = arith.mulf %68, %69 : vector<16x16xf32>
    %71 = arith.addf %70, %28 : vector<16x16xf32>
    %cst_28 = arith.constant dense<0xFF800000> : vector<16xf32>
    %72 = vector.multi_reduction <maximumf>, %71, %cst_28 [1] : vector<16x16xf32> to vector<16xf32>
    %73 = vector.shape_cast %72 : vector<16xf32> to vector<16x1xf32>
    %74 = vector.broadcast %73 : vector<16x1xf32> to vector<16x16xf32>
    %75 = arith.subf %71, %74 : vector<16x16xf32>
    %76 = math.exp %75 : vector<16x16xf32>
    %cst_29 = arith.constant dense<0.000000e+00> : vector<16xf32>
    %77 = vector.multi_reduction <add>, %76, %cst_29 [1] : vector<16x16xf32> to vector<16xf32>
    %78 = vector.shape_cast %77 : vector<16xf32> to vector<16x1xf32>
    %79 = tpu.reciprocal %78 {approx = true} : vector<16x1xf32> -> vector<16x1xf32>
    %80 = vector.broadcast %79 : vector<16x1xf32> to vector<16x16xf32>
    %81 = arith.mulf %76, %80 : vector<16x16xf32>
    %cst_30 = arith.constant dense<0.000000e+00> : vector<16x8xf32>
    %82 = tpu.matmul %81, %67, %cst_30 {dimension_numbers = #tpu.dot_dimension_numbers<[1], [0], [0], [1], [0, 0, 1, 1], [], []>} : vector<16x16xf32>, vector<16x8xf32>, vector<16x8xf32> -> vector<16x8xf32>
    %83 = vector.extract_strided_slice %27 {offsets = [0, 24], sizes = [16, 8], strides = [1, 1]} : vector<16x48xf32> to vector<16x8xf32>
    %84 = vector.extract_strided_slice %27 {offsets = [0, 40], sizes = [16, 8], strides = [1, 1]} : vector<16x48xf32> to vector<16x8xf32>
    %85 = vector.extract_strided_slice %17 {offsets = [0, 8], sizes = [16, 8], strides = [1, 1]} : vector<16x16xf32> to vector<16x8xf32>
    %cst_31 = arith.constant dense<0.000000e+00> : vector<16x16xf32>
    %86 = tpu.matmul %83, %84, %cst_31 {dimension_numbers = #tpu.dot_dimension_numbers<[1], [1], [0], [0], [0, 0, 1, 0], [], []>} : vector<16x8xf32>, vector<16x8xf32>, vector<16x16xf32> -> vector<16x16xf32>
    %cst_32 = arith.constant 0.353553385 : f32
    %87 = vector.broadcast %cst_32 : f32 to vector<16x16xf32>
    %88 = arith.mulf %86, %87 : vector<16x16xf32>
    %89 = arith.addf %88, %28 : vector<16x16xf32>
    %cst_33 = arith.constant dense<0xFF800000> : vector<16xf32>
    %90 = vector.multi_reduction <maximumf>, %89, %cst_33 [1] : vector<16x16xf32> to vector<16xf32>
    %91 = vector.shape_cast %90 : vector<16xf32> to vector<16x1xf32>
    %92 = vector.broadcast %91 : vector<16x1xf32> to vector<16x16xf32>
    %93 = arith.subf %89, %92 : vector<16x16xf32>
    %94 = math.exp %93 : vector<16x16xf32>
    %cst_34 = arith.constant dense<0.000000e+00> : vector<16xf32>
    %95 = vector.multi_reduction <add>, %94, %cst_34 [1] : vector<16x16xf32> to vector<16xf32>
    %96 = vector.shape_cast %95 : vector<16xf32> to vector<16x1xf32>
    %97 = tpu.reciprocal %96 {approx = true} : vector<16x1xf32> -> vector<16x1xf32>
    %98 = vector.broadcast %97 : vector<16x1xf32> to vector<16x16xf32>
    %99 = arith.mulf %94, %98 : vector<16x16xf32>
    %cst_35 = arith.constant dense<0.000000e+00> : vector<16x8xf32>
    %100 = tpu.matmul %99, %85, %cst_35 {dimension_numbers = #tpu.dot_dimension_numbers<[1], [0], [0], [1], [0, 0, 1, 1], [], []>} : vector<16x16xf32>, vector<16x8xf32>, vector<16x8xf32> -> vector<16x8xf32>
    %101 = tpu.concatenate %46, %64, %82, %100 in 1 : vector<16x8xf32>, vector<16x8xf32>, vector<16x8xf32>, vector<16x8xf32> -> vector<16x32xf32>
    %c0_36 = arith.constant 0 : index
    %c0_37 = arith.constant 0 : index
    %102 = vector.load %arg6[%c0_36, %c0_37] : memref<32x32xf32, #tpu.memory_space<vmem>>, vector<32x32xf32>
    %cst_38 = arith.constant dense<0.000000e+00> : vector<16x32xf32>
    %103 = tpu.matmul %101, %102, %cst_38 {dimension_numbers = #tpu.dot_dimension_numbers<[1], [0], [0], [1], [0, 0, 1, 1], [], []>} : vector<16x32xf32>, vector<32x32xf32>, vector<16x32xf32> -> vector<16x32xf32>
    %c0_39 = arith.constant 0 : index
    %c0_40 = arith.constant 0 : index
    %104 = vector.load %arg7[%c0_39, %c0_40] : memref<1x32xf32, #tpu.memory_space<vmem>>, vector<1x32xf32>
    %105 = vector.broadcast %104 : vector<1x32xf32> to vector<16x32xf32>
    %106 = arith.mulf %105, %103 : vector<16x32xf32>
    %107 = arith.addf %0, %106 : vector<16x32xf32>
    %c0_41 = arith.constant 0 : index
    %c0_42 = arith.constant 0 : index
    %108 = vector.load %arg8[%c0_41, %c0_42] : memref<1x32xf32, #tpu.memory_space<vmem>>, vector<1x32xf32>
    %109 = arith.mulf %107, %107 : vector<16x32xf32>
    %cst_43 = arith.constant dense<0.000000e+00> : vector<16xf32>
    %110 = vector.multi_reduction <add>, %109, %cst_43 [1] : vector<16x32xf32> to vector<16xf32>
    %111 = vector.shape_cast %110 : vector<16xf32> to vector<16x1xf32>
    %cst_44 = arith.constant 3.200000e+01 : f32
    %112 = vector.broadcast %cst_44 : f32 to vector<16x1xf32>
    %113 = arith.divf %111, %112 : vector<16x1xf32>
    %cst_45 = arith.constant 9.99999997E-7 : f32
    %114 = vector.broadcast %cst_45 : f32 to vector<16x1xf32>
    %115 = arith.addf %113, %114 : vector<16x1xf32>
    %116 = math.rsqrt %115 : vector<16x1xf32>
    %117 = vector.broadcast %116 : vector<16x1xf32> to vector<16x32xf32>
    %118 = arith.mulf %107, %117 : vector<16x32xf32>
    %119 = vector.broadcast %108 : vector<1x32xf32> to vector<16x32xf32>
    %120 = arith.mulf %118, %119 : vector<16x32xf32>
    %c0_46 = arith.constant 0 : index
    %c0_47 = arith.constant 0 : index
    %121 = vector.load %arg9[%c0_46, %c0_47] : memref<32x256xf32, #tpu.memory_space<vmem>>, vector<32x256xf32>
    %cst_48 = arith.constant dense<0.000000e+00> : vector<16x256xf32>
    %122 = tpu.matmul %120, %121, %cst_48 {dimension_numbers = #tpu.dot_dimension_numbers<[1], [0], [0], [1], [0, 0, 1, 1], [], []>} : vector<16x32xf32>, vector<32x256xf32>, vector<16x256xf32> -> vector<16x256xf32>
    %123 = vector.extract_strided_slice %122 {offsets = [0, 0], sizes = [16, 128], strides = [1, 1]} : vector<16x256xf32> to vector<16x128xf32>
    %124 = arith.negf %123 : vector<16x128xf32>
    %125 = math.exp %124 : vector<16x128xf32>
    %cst_49 = arith.constant 1.000000e+00 : f32
    %126 = vector.broadcast %cst_49 : f32 to vector<16x128xf32>
    %127 = arith.addf %126, %125 : vector<16x128xf32>
    %128 = arith.divf %126, %127 : vector<16x128xf32>
    %129 = arith.mulf %123, %128 : vector<16x128xf32>
    %130 = vector.extract_strided_slice %122 {offsets = [0, 128], sizes = [16, 128], strides = [1, 1]} : vector<16x256xf32> to vector<16x128xf32>
    %131 = arith.mulf %129, %130 : vector<16x128xf32>
    %c0_50 = arith.constant 0 : index
    %c0_51 = arith.constant 0 : index
    %132 = vector.load %arg10[%c0_50, %c0_51] : memref<128x32xf32, #tpu.memory_space<vmem>>, vector<128x32xf32>
    %cst_52 = arith.constant dense<0.000000e+00> : vector<16x32xf32>
    %133 = tpu.matmul %131, %132, %cst_52 {dimension_numbers = #tpu.dot_dimension_numbers<[1], [0], [0], [1], [0, 0, 1, 1], [], []>} : vector<16x128xf32>, vector<128x32xf32>, vector<16x32xf32> -> vector<16x32xf32>
    %134 = arith.addf %107, %133 : vector<16x32xf32>
    %c0_53 = arith.constant 0 : index
    %c0_54 = arith.constant 0 : index
    %135 = vector.load %arg11[%c0_53, %c0_54] : memref<16x32xf32, #tpu.memory_space<vmem>>, vector<16x32xf32>
    tpu.vector_store %arg11[%c0_53, %c0_54], %134 {strides = array<i32>} : memref<16x32xf32, #tpu.memory_space<vmem>>, vector<16x32xf32>,
    return
  }
}

</mosaic_0001>

<llo_original>
// kernel: tpu_custom_call.1
$region0: #{tpu_custom_call.1}
  #allocation0 [shape = 'u32[]', space=smem, size = 0x4, offset = 0x4, fixed_abs, tag = 'smem constant byte address 0x4 - core index']
  #allocation1 [shape = 'u32[144,128]{1,0:T(1,128)}', space=vmem, size = 0x12000, scoped, tag = 'internal scratch']
  %s0 = inlined_call_operand.vmem [shape: f32[16,32], index: 0, kind: input, shape index: {}]
  %s1 = inlined_call_operand.hbm [shape: f32[16,16], index: 1, kind: input, shape index: {}]
  %s2 = inlined_call_operand.vmem [shape: f32[1,32], index: 2, kind: input, shape index: {}]
  %s3 = inlined_call_operand.vmem [shape: f32[32,64], index: 3, kind: input, shape index: {}]
  %s4 = inlined_call_operand.vmem [shape: f32[48,48], index: 4, kind: input, shape index: {}]
  %s5 = inlined_call_operand.vmem [shape: f32[1,48], index: 5, kind: input, shape index: {}]
  %s6 = inlined_call_operand.hbm [shape: f32[32,32], index: 6, kind: input, shape index: {}]
  %s7 = inlined_call_operand.vmem [shape: f32[1,32], index: 7, kind: input, shape index: {}]
  %s8 = inlined_call_operand.vmem [shape: f32[1,32], index: 8, kind: input, shape index: {}]
  %s9 = inlined_call_operand.vmem [shape: f32[32,256], index: 9, kind: input, shape index: {}]
  %s10 = inlined_call_operand.vmem [shape: f32[128,32], index: 10, kind: input, shape index: {}]
  %s11 = inlined_call_operand.hbm [shape: f32[16,32], index: 11, kind: output, shape index: {}]
  %s12 = sld [smem:[#allocation0]]
  $region62: #{tpu_custom_call.1} parent=0
    _
  %s14 = ssub.s32 1, %s12
  %s15 = scalar_select 0, %s14, %s12
  $region1: #{tpu_custom_call.1} parent=0
    #allocation2 [shape = 'u8[8192]{0}', space=vmem, size = 0x2000, scoped, tag = 'input window, operand 1, single buffered']
    #allocation3 [shape = 's32[1]{0}', space=sflag, size = 0x4, scoped, tag = 'scoped memory for tpu_custom_call.1']
    #allocation4 [shape = 's32[1]{0}', space=sflag, size = 0x4, scoped, tag = 'scoped memory for tpu_custom_call.1']
    #allocation5 [shape = 'u8[16384]{0}', space=vmem, size = 0x4000, scoped, tag = 'input window, operand 6, single buffered']
    #allocation6 [shape = 's32[1]{0}', space=sflag, size = 0x4, scoped, tag = 'scoped memory for tpu_custom_call.1']
    #allocation7 [shape = 'u8[8192]{0}', space=vmem, size = 0x2000, scoped, tag = 'output window, operand 0, single buffered']
    %16 = vsyncpa [#allocation3], 0
    %17 = vsyncpa [#allocation6], 0
    %18 = vsyncpa [#allocation4], 0
    // Predicated region
    $region2: #{tpu_custom_call.1} parent=1 // pred_check
      _
    $region3: #{tpu_custom_call.1} parent=1 // pred_check_branch
      %20 = sbr.rel (0) target = $region5
    $region4: #{tpu_custom_call.1} parent=1 // pred_region
      _
    $region5: #{tpu_custom_call.1} parent=1 // pred_fallthru
      _
    // Predicated region
    $region6: #{tpu_custom_call.1} parent=1 // pred_check
      _
    $region7: #{tpu_custom_call.1} parent=1 // pred_check_branch
      %22 = sbr.rel (0) target = $region9
    $region8: #{tpu_custom_call.1} parent=1 // pred_region
      %s24 = ssub.s32 256, 256
      %25 = vsyncadd [#allocation3], %s24
      %s26 = sshll.u32 [#allocation2], 4
      %s27 = int_to_ptr.vmem [resolvable:$true] %s26
      %32 = dma.hbm_to_vmem [thread:$0]  %s1, 256, %s27, [#allocation3], 128, 128, 8
    $region9: #{tpu_custom_call.1} parent=1 // pred_fallthru
      _
    // Predicated region
    $region10: #{tpu_custom_call.1} parent=1 // pred_check
      _
    $region11: #{tpu_custom_call.1} parent=1 // pred_check_branch
      %34 = sbr.rel (0) target = $region13
    $region12: #{tpu_custom_call.1} parent=1 // pred_region
      _
    $region13: #{tpu_custom_call.1} parent=1 // pred_fallthru
      _
    // Predicated region
    $region14: #{tpu_custom_call.1} parent=1 // pred_check
      _
    $region15: #{tpu_custom_call.1} parent=1 // pred_check_branch
      %36 = sbr.rel (0) target = $region17
    $region16: #{tpu_custom_call.1} parent=1 // pred_region
      _
    $region17: #{tpu_custom_call.1} parent=1 // pred_fallthru
      _
    // Predicated region
    $region18: #{tpu_custom_call.1} parent=1 // pred_check
      _
    $region19: #{tpu_custom_call.1} parent=1 // pred_check_branch
      %38 = sbr.rel (0) target = $region21
    $region20: #{tpu_custom_call.1} parent=1 // pred_region
      _
    $region21: #{tpu_custom_call.1} parent=1 // pred_fallthru
      _
    // Predicated region
    $region22: #{tpu_custom_call.1} parent=1 // pred_check
      _
    $region23: #{tpu_custom_call.1} parent=1 // pred_check_branch
      %40 = sbr.rel (0) target = $region25
    $region24: #{tpu_custom_call.1} parent=1 // pred_region
      _
    $region25: #{tpu_custom_call.1} parent=1 // pred_fallthru
      _
    // Predicated region
    $region26: #{tpu_custom_call.1} parent=1 // pred_check
      _
    $region27: #{tpu_custom_call.1} parent=1 // pred_check_branch
      %42 = sbr.rel (0) target = $region29
    $region28: #{tpu_custom_call.1} parent=1 // pred_region
      %s44 = ssub.s32 512, 512
      %45 = vsyncadd [#allocation6], %s44
      %s46 = sshll.u32 [#allocation5], 4
      %s47 = int_to_ptr.vmem [resolvable:$true] %s46
      %52 = dma.hbm_to_vmem [thread:$0]  %s6, 512, %s47, [#allocation6], 128, 128, 8
    $region29: #{tpu_custom_call.1} parent=1 // pred_fallthru
      _
    // Predicated region
    $region30: #{tpu_custom_call.1} parent=1 // pred_check
      _
    $region31: #{tpu_custom_call.1} parent=1 // pred_check_branch
      %54 = sbr.rel (0) target = $region33
    $region32: #{tpu_custom_call.1} parent=1 // pred_region
      _
    $region33: #{tpu_custom_call.1} parent=1 // pred_fallthru
      _
    // Predicated region
    $region34: #{tpu_custom_call.1} parent=1 // pred_check
      _
    $region35: #{tpu_custom_call.1} parent=1 // pred_check_branch
      %56 = sbr.rel (0) target = $region37
    $region36: #{tpu_custom_call.1} parent=1 // pred_region
      _
    $region37: #{tpu_custom_call.1} parent=1 // pred_fallthru
      _
    // Predicated region
    $region38: #{tpu_custom_call.1} parent=1 // pred_check
      _
    $region39: #{tpu_custom_call.1} parent=1 // pred_check_branch
      %58 = sbr.rel (0) target = $region41
    $region40: #{tpu_custom_call.1} parent=1 // pred_region
      _
    $region41: #{tpu_custom_call.1} parent=1 // pred_fallthru
      _
    // Predicated region
    $region42: #{tpu_custom_call.1} parent=1 // pred_check
      _
    $region43: #{tpu_custom_call.1} parent=1 // pred_check_branch
      %60 = sbr.rel (0) target = $region45
    $region44: #{tpu_custom_call.1} parent=1 // pred_region
      _
    $region45: #{tpu_custom_call.1} parent=1 // pred_fallthru
      _
    // Predicated region
    $region46: #{tpu_custom_call.1} parent=1 // pred_check
      _
    $region47: #{tpu_custom_call.1} parent=1 // pred_check_branch
      %62 = sbr.rel (0) target = $region49
    $region48: #{tpu_custom_call.1} parent=1 // pred_region
      %63 = dma.done [#allocation3], 256
    $region49: #{tpu_custom_call.1} parent=1 // pred_fallthru
      _
    // Predicated region
    $region50: #{tpu_custom_call.1} parent=1 // pred_check
      _
    $region51: #{tpu_custom_call.1} parent=1 // pred_check_branch
      %65 = sbr.rel (0) target = $region53
    $region52: #{tpu_custom_call.1} parent=1 // pred_region
      %66 = dma.done [#allocation6], 512
    $region53: #{tpu_custom_call.1} parent=1 // pred_fallthru
      _
    %v67 = vld [vmem:[%s0] sm:$0xff]
    %v68 = vld [vmem:[%s0 + $0x8] sm:$0xff]
    %v69 = vld [vmem:[%s2] sm:$0x1]
    %v70 = vmul.f32 %v67, %v67
    %v71 = vmul.f32 %v68, %v68
    %vm72 = vcmask 261120
    %v73 = vsel %vm72, %v70, 0.0
    %74 = vadd.xlane.f32.xlu0 %v73
    %v75 = vpop.xlane.xlu0 %74
    %v76 = vsel %vm72, %v71, 0.0
    %77 = vadd.xlane.f32.xlu0 %v76
    %v78 = vpop.xlane.xlu0 %77
    %v79 = vrcp.pop 32.0
    %v80 = vmul.f32 %v75, %v79
    %v81 = vmul.f32 %v78, %v79
    %v82 = vadd.f32 %v80, 1e-06
    %v83 = vadd.f32 %v81, 1e-06
    %v84 = vrsqrt.pop %v82
    %v85 = vrsqrt.pop %v83
    %v86 = vmul.f32 %v67, %v84
    %v87 = vmul.f32 %v68, %v85
    %v89 = vlaneseq
    %v90 = vshrl.u32 %v89, 7
    %v91 = vsub.s32 0, %v90
    %v92 = vrot.slane %v69, %v91
    %v94 = vmul.f32 %v86, %v92
    %v95 = vmul.f32 %v87, %v92
    %v96 = vld [vmem:[%s3] sm:$0xff]
    %v97 = vld [vmem:[%s3 + $0x8] sm:$0xff]
    %v98 = vld [vmem:[%s3 + $0x10] sm:$0xff]
    %v99 = vld [vmem:[%s3 + $0x18] sm:$0xff]
    %v101 = vsel %vm72, %v94, 0
    %v104 = vsel %vm72, %v95, 0
    %106 = vmatprep.subr.mxu0 0.0
    %107 = vmatpush1.msra.mxu0 0.0
    %108 = vmatprep.subr.mxu0 0.0
    %109 = vmatpush1.msra.mxu0 0.0
    %110 = vmatprep.subr.mxu0 0.0
    %111 = vmatpush1.msra.mxu0 0.0
    %112 = vmatprep.subr.mxu0 0.0
    %113 = vmatpush1.msra.mxu0 0.0
    %114 = vmatprep.subr.mxu0 0.0
    %115 = vmatpush1.msra.mxu0 0.0
    %116 = vmatprep.subr.mxu0 0.0
    %117 = vmatpush1.msra.mxu0 0.0
    %118 = vmatprep.subr.mxu0 0.0
    %119 = vmatpush1.msra.mxu0 0.0
    %120 = vmatprep.subr.mxu0 0.0
    %121 = vmatpush1.msra.mxu0 0.0
    %122 = vmatprep.subr.mxu0 0.0
    %123 = vmatpush1.msra.mxu0 0.0
    %124 = vmatprep.subr.mxu0 0.0
    %125 = vmatpush1.msra.mxu0 0.0
    %126 = vmatprep.subr.mxu0 0.0
    %127 = vmatpush1.msra.mxu0 0.0
    %128 = vmatprep.subr.mxu0 0.0
    %129 = vmatpush1.msra.mxu0 0.0
    %130 = vmatprep.subr.mxu0 0.0
    %131 = vmatpush1.msra.mxu0 %v99
    %132 = vmatprep.subr.mxu0 0.0
    %133 = vmatpush1.msra.mxu0 %v98
    %134 = vmatprep.subr.mxu0 0.0
    %135 = vmatpush1.msra.mxu0 %v97
    %136 = vmatprep.subr.mxu0 0.0
    %137 = vmatpush1.msra.mxu0 %v96
    %138 = vmatprep.subr.mxu0 0.0
    %139 = vmatpush2.msra.mxu0 0.0
    %140 = vmatprep.subr.mxu0 0.0
    %141 = vmatpush2.msra.mxu0 0.0
    %142 = vmatprep.subr.mxu0 0.0
    %143 = vmatpush2.msra.mxu0 0.0
    %144 = vmatprep.subr.mxu0 0.0
    %145 = vmatpush2.msra.mxu0 0.0
    %146 = vmatprep.subr.mxu0 0.0
    %147 = vmatpush2.msra.mxu0 0.0
    %148 = vmatprep.subr.mxu0 0.0
    %149 = vmatpush2.msra.mxu0 0.0
    %150 = vmatprep.subr.mxu0 0.0
    %151 = vmatpush2.msra.mxu0 0.0
    %152 = vmatprep.subr.mxu0 0.0
    %153 = vmatpush2.msra.mxu0 0.0
    %154 = vmatprep.subr.mxu0 0.0
    %155 = vmatpush2.msra.mxu0 0.0
    %156 = vmatprep.subr.mxu0 0.0
    %157 = vmatpush2.msra.mxu0 0.0
    %158 = vmatprep.subr.mxu0 0.0
    %159 = vmatpush2.msra.mxu0 0.0
    %160 = vmatprep.subr.mxu0 0.0
    %161 = vmatpush2.msra.mxu0 0.0
    %162 = vmatprep.subr.mxu0 0.0
    %163 = vmatpush2.msra.mxu0 0.0
    %164 = vmatprep.subr.mxu0 0.0
    %165 = vmatpush2.msra.mxu0 0.0
    %166 = vmatprep.subr.mxu0 0.0
    %167 = vmatpush2.msra.mxu0 0.0
    %168 = vmatprep.subr.mxu0 0.0
    %169 = vmatpush2.msra.mxu0 0.0
    %170 = vmatprep.mubr.f32.mxu0 0.0
    %171 = vmatmul.mubr.f32.gmra.mxu0 %v101
    %v172 = vpop.f32.mrf.mxu0
    %v173 = vadd.f32 0.0, %v172
    %v174 = vpop.f32.mrf.mxu0
    %175 = vmatprep.mubr.f32.mxu0 0.0
    %176 = vmatmul.mubr.f32.gmra.mxu0 %v104
    %v177 = vpop.f32.mrf.mxu0
    %v178 = vadd.f32 0.0, %v177
    %v179 = vpop.f32.mrf.mxu0
    %180 = vdwg.mxu0
    %v181 = vmul.f32 %v173, %v173
    %v182 = vmul.f32 %v178, %v178
    %v183 = vld [vmem:[%s4] sm:$0xff]
    %v184 = vld [vmem:[%s4 + $0x8] sm:$0xff]
    %v185 = vld [vmem:[%s4 + $0x10] sm:$0xff]
    %v186 = vld [vmem:[%s4 + $0x18] sm:$0xff]
    %v187 = vld [vmem:[%s4 + $0x20] sm:$0xff]
    %v188 = vld [vmem:[%s4 + $0x28] sm:$0xff]
    %vm189 = vcmask 392192
    %v191 = vsel %vm189, %v181, 0
    %v194 = vsel %vm189, %v182, 0
    %196 = vmatprep.subr.mxu0 0.0
    %197 = vmatpush1.msra.mxu0 0.0
    %198 = vmatprep.subr.mxu0 0.0
    %199 = vmatpush1.msra.mxu0 0.0
    %200 = vmatprep.subr.mxu0 0.0
    %201 = vmatpush1.msra.mxu0 0.0
    %202 = vmatprep.subr.mxu0 0.0
    %203 = vmatpush1.msra.mxu0 0.0
    %204 = vmatprep.subr.mxu0 0.0
    %205 = vmatpush1.msra.mxu0 0.0
    %206 = vmatprep.subr.mxu0 0.0
    %207 = vmatpush1.msra.mxu0 0.0
    %208 = vmatprep.subr.mxu0 0.0
    %209 = vmatpush1.msra.mxu0 0.0
    %210 = vmatprep.subr.mxu0 0.0
    %211 = vmatpush1.msra.mxu0 0.0
    %212 = vmatprep.subr.mxu0 0.0
    %213 = vmatpush1.msra.mxu0 0.0
    %214 = vmatprep.subr.mxu0 0.0
    %215 = vmatpush1.msra.mxu0 0.0
    %216 = vmatprep.subr.mxu0 0.0
    %217 = vmatpush1.msra.mxu0 %v188
    %218 = vmatprep.subr.mxu0 0.0
    %219 = vmatpush1.msra.mxu0 %v187
    %220 = vmatprep.subr.mxu0 0.0
    %221 = vmatpush1.msra.mxu0 %v186
    %222 = vmatprep.subr.mxu0 0.0
    %223 = vmatpush1.msra.mxu0 %v185
    %224 = vmatprep.subr.mxu0 0.0
    %225 = vmatpush1.msra.mxu0 %v184
    %226 = vmatprep.subr.mxu0 0.0
    %227 = vmatpush1.msra.mxu0 %v183
    %228 = vmatprep.subr.mxu0 0.0
    %229 = vmatpush2.msra.mxu0 0.0
    %230 = vmatprep.subr.mxu0 0.0
    %231 = vmatpush2.msra.mxu0 0.0
    %232 = vmatprep.subr.mxu0 0.0
    %233 = vmatpush2.msra.mxu0 0.0
    %234 = vmatprep.subr.mxu0 0.0
    %235 = vmatpush2.msra.mxu0 0.0
    %236 = vmatprep.subr.mxu0 0.0
    %237 = vmatpush2.msra.mxu0 0.0
    %238 = vmatprep.subr.mxu0 0.0
    %239 = vmatpush2.msra.mxu0 0.0
    %240 = vmatprep.subr.mxu0 0.0
    %241 = vmatpush2.msra.mxu0 0.0
    %242 = vmatprep.subr.mxu0 0.0
    %243 = vmatpush2.msra.mxu0 0.0
    %244 = vmatprep.subr.mxu0 0.0
    %245 = vmatpush2.msra.mxu0 0.0
    %246 = vmatprep.subr.mxu0 0.0
    %247 = vmatpush2.msra.mxu0 0.0
    %248 = vmatprep.subr.mxu0 0.0
    %249 = vmatpush2.msra.mxu0 0.0
    %250 = vmatprep.subr.mxu0 0.0
    %251 = vmatpush2.msra.mxu0 0.0
    %252 = vmatprep.subr.mxu0 0.0
    %253 = vmatpush2.msra.mxu0 0.0
    %254 = vmatprep.subr.mxu0 0.0
    %255 = vmatpush2.msra.mxu0 0.0
    %256 = vmatprep.subr.mxu0 0.0
    %257 = vmatpush2.msra.mxu0 0.0
    %258 = vmatprep.subr.mxu0 0.0
    %259 = vmatpush2.msra.mxu0 0.0
    %260 = vmatprep.mubr.f32.mxu0 0.0
    %261 = vmatmul.mubr.f32.gmra.mxu0 %v191
    %v262 = vpop.f32.mrf.mxu0
    %v263 = vadd.f32 1e-06, %v262
    %v264 = vpop.f32.mrf.mxu0
    %265 = vmatprep.mubr.f32.mxu0 0.0
    %266 = vmatmul.mubr.f32.gmra.mxu0 %v194
    %v267 = vpop.f32.mrf.mxu0
    %v268 = vadd.f32 1e-06, %v267
    %v269 = vpop.f32.mrf.mxu0
    %270 = vdwg.mxu0
    %v271 = vrsqrt.pop %v263
    %v272 = vrsqrt.pop %v268
    %v273 = vmul.f32 %v173, %v271
    %v274 = vmul.f32 %v178, %v272
    %v275 = vld [vmem:[%s5] sm:$0x1]
    %v277 = vlaneseq
    %v278 = vshrl.u32 %v277, 7
    %v279 = vsub.s32 0, %v278
    %v280 = vrot.slane %v275, %v279
    %v282 = vmul.f32 %v273, %v280
    %v283 = vmul.f32 %v274, %v280
    %v284 = vld [vmem:[#allocation2] sm:$0xff]
    %v285 = vld [vmem:[#allocation2 + $0x8] sm:$0xff]
    %288 = vrot.lane.b32.xlu0 %v282, 96
    %v289 = vpop.permute.xlu0 %288
    %290 = vrot.lane.b32.xlu0 %v283, 96
    %v291 = vpop.permute.xlu0 %290
    %vm292 = vcmask 64512
    %v293 = vsel %vm292, %v282, 0
    %v295 = vsel %vm292, %v283, 0
    %v297 = vsel %vm292, %v289, 0
    %v299 = vsel %vm292, %v291, 0
    %301 = vmatprep.subr.mxu0 0.0
    %302 = vmatpush1.xpose.msra.mxu0 0.0
    %303 = vmatprep.subr.mxu0 0.0
    %304 = vmatpush1.xpose.msra.mxu0 0.0
    %305 = vmatprep.subr.mxu0 0.0
    %306 = vmatpush1.xpose.msra.mxu0 0.0
    %307 = vmatprep.subr.mxu0 0.0
    %308 = vmatpush1.xpose.msra.mxu0 0.0
    %309 = vmatprep.subr.mxu0 0.0
    %310 = vmatpush1.xpose.msra.mxu0 0.0
    %311 = vmatprep.subr.mxu0 0.0
    %312 = vmatpush1.xpose.msra.mxu0 0.0
    %313 = vmatprep.subr.mxu0 0.0
    %314 = vmatpush1.xpose.msra.mxu0 0.0
    %315 = vmatprep.subr.mxu0 0.0
    %316 = vmatpush1.xpose.msra.mxu0 0.0
    %317 = vmatprep.subr.mxu0 0.0
    %318 = vmatpush1.xpose.msra.mxu0 0.0
    %319 = vmatprep.subr.mxu0 0.0
    %320 = vmatpush1.xpose.msra.mxu0 0.0
    %321 = vmatprep.subr.mxu0 0.0
    %322 = vmatpush1.xpose.msra.mxu0 0.0
    %323 = vmatprep.subr.mxu0 0.0
    %324 = vmatpush1.xpose.msra.mxu0 0.0
    %325 = vmatprep.subr.mxu0 0.0
    %326 = vmatpush1.xpose.msra.mxu0 0.0
    %327 = vmatprep.subr.mxu0 0.0
    %328 = vmatpush1.xpose.msra.mxu0 0.0
    %329 = vmatprep.subr.mxu0 0.0
    %330 = vmatpush1.xpose.msra.mxu0 %v299
    %331 = vmatprep.subr.mxu0 0.0
    %332 = vmatpush1.xpose.msra.mxu0 %v297
    %333 = vmatprep.subr.mxu0 0.0
    %334 = vmatpush2.xpose.msra.mxu0 0.0
    %335 = vmatprep.subr.mxu0 0.0
    %336 = vmatpush2.xpose.msra.mxu0 0.0
    %337 = vmatprep.subr.mxu0 0.0
    %338 = vmatpush2.xpose.msra.mxu0 0.0
    %339 = vmatprep.subr.mxu0 0.0
    %340 = vmatpush2.xpose.msra.mxu0 0.0
    %341 = vmatprep.subr.mxu0 0.0
    %342 = vmatpush2.xpose.msra.mxu0 0.0
    %343 = vmatprep.subr.mxu0 0.0
    %344 = vmatpush2.xpose.msra.mxu0 0.0
    %345 = vmatprep.subr.mxu0 0.0
    %346 = vmatpush2.xpose.msra.mxu0 0.0
    %347 = vmatprep.subr.mxu0 0.0
    %348 = vmatpush2.xpose.msra.mxu0 0.0
    %349 = vmatprep.subr.mxu0 0.0
    %350 = vmatpush2.xpose.msra.mxu0 0.0
    %351 = vmatprep.subr.mxu0 0.0
    %352 = vmatpush2.xpose.msra.mxu0 0.0
    %353 = vmatprep.subr.mxu0 0.0
    %354 = vmatpush2.xpose.msra.mxu0 0.0
    %355 = vmatprep.subr.mxu0 0.0
    %356 = vmatpush2.xpose.msra.mxu0 0.0
    %357 = vmatprep.subr.mxu0 0.0
    %358 = vmatpush2.xpose.msra.mxu0 0.0
    %359 = vmatprep.subr.mxu0 0.0
    %360 = vmatpush2.xpose.msra.mxu0 0.0
    %361 = vmatprep.subr.mxu0 0.0
    %362 = vmatpush2.xpose.msra.mxu0 0.0
    %363 = vmatprep.subr.mxu0 0.0
    %364 = vmatpush2.xpose.msra.mxu0 0.0
    %365 = vmatprep.mubr.f32.mxu0 0.0
    %366 = vmatmul.mubr.f32.gmra.mxu0 %v293
    %v367 = vpop.f32.mrf.mxu0
    %v368 = vadd.f32 0.0, %v367
    %v369 = vpop.f32.mrf.mxu0
    %370 = vmatprep.mubr.f32.mxu0 0.0
    %371 = vmatmul.mubr.f32.gmra.mxu0 %v295
    %v372 = vpop.f32.mrf.mxu0
    %v373 = vadd.f32 0.0, %v372
    %v374 = vpop.f32.mrf.mxu0
    %375 = vdwg.mxu0
    %v376 = vmul.f32 %v368, 0.35355338
    %v377 = vmul.f32 %v373, 0.35355338
    %v378 = vadd.f32 %v376, %v284
    %v379 = vadd.f32 %v377, %v285
    %vm380 = vcmask 130048
    %v381 = vsel %vm380, %v378, -inf
    %382 = vmax.xlane.f32.xlu0 %v381
    %v383 = vpop.xlane.xlu0 %382
    %v384 = vsel %vm380, %v379, -inf
    %385 = vmax.xlane.f32.xlu0 %v384
    %v386 = vpop.xlane.xlu0 %385
    %v387 = vsub.f32 %v378, %v383
    %v388 = vsub.f32 %v379, %v386
    %v389 = vmul.f32 %v387, 1.442695
    %v390 = vpow.pop %v389
    %v391 = vmul.f32 %v388, 1.442695
    %v392 = vpow.pop %v391
    %v393 = vsel %vm380, %v390, 0.0
    %394 = vadd.xlane.f32.xlu0 %v393
    %v395 = vpop.xlane.xlu0 %394
    %v396 = vsel %vm380, %v392, 0.0
    %397 = vadd.xlane.f32.xlu0 %v396
    %v398 = vpop.xlane.xlu0 %397
    %v399 = vrcp.pop %v395
    %v400 = vrcp.pop %v398
    %v401 = vmul.f32 %v390, %v399
    %v402 = vmul.f32 %v392, %v400
    %405 = vrot.lane.b32.xlu0 %v173, 80
    %v406 = vpop.permute.xlu0 %405
    %407 = vrot.lane.b32.xlu0 %v178, 80
    %v408 = vpop.permute.xlu0 %407
    %v412 = vsel %vm380, %v401, 0
    %v415 = vsel %vm380, %v402, 0
    %417 = vmatprep.subr.mxu0 0.0
    %418 = vmatpush1.msra.mxu0 0.0
    %419 = vmatprep.subr.mxu0 0.0
    %420 = vmatpush1.msra.mxu0 0.0
    %421 = vmatprep.subr.mxu0 0.0
    %422 = vmatpush1.msra.mxu0 0.0
    %423 = vmatprep.subr.mxu0 0.0
    %424 = vmatpush1.msra.mxu0 0.0
    %425 = vmatprep.subr.mxu0 0.0
    %426 = vmatpush1.msra.mxu0 0.0
    %427 = vmatprep.subr.mxu0 0.0
    %428 = vmatpush1.msra.mxu0 0.0
    %429 = vmatprep.subr.mxu0 0.0
    %430 = vmatpush1.msra.mxu0 0.0
    %431 = vmatprep.subr.mxu0 0.0
    %432 = vmatpush1.msra.mxu0 0.0
    %433 = vmatprep.subr.mxu0 0.0
    %434 = vmatpush1.msra.mxu0 0.0
    %435 = vmatprep.subr.mxu0 0.0
    %436 = vmatpush1.msra.mxu0 0.0
    %437 = vmatprep.subr.mxu0 0.0
    %438 = vmatpush1.msra.mxu0 0.0
    %439 = vmatprep.subr.mxu0 0.0
    %440 = vmatpush1.msra.mxu0 0.0
    %441 = vmatprep.subr.mxu0 0.0
    %442 = vmatpush1.msra.mxu0 0.0
    %443 = vmatprep.subr.mxu0 0.0
    %444 = vmatpush1.msra.mxu0 0.0
    %445 = vmatprep.subr.mxu0 0.0
    %446 = vmatpush1.msra.mxu0 %v408
    %447 = vmatprep.subr.mxu0 0.0
    %448 = vmatpush1.msra.mxu0 %v406
    %449 = vmatprep.subr.mxu0 0.0
    %450 = vmatpush2.msra.mxu0 0.0
    %451 = vmatprep.subr.mxu0 0.0
    %452 = vmatpush2.msra.mxu0 0.0
    %453 = vmatprep.subr.mxu0 0.0
    %454 = vmatpush2.msra.mxu0 0.0
    %455 = vmatprep.subr.mxu0 0.0
    %456 = vmatpush2.msra.mxu0 0.0
    %457 = vmatprep.subr.mxu0 0.0
    %458 = vmatpush2.msra.mxu0 0.0
    %459 = vmatprep.subr.mxu0 0.0
    %460 = vmatpush2.msra.mxu0 0.0
    %461 = vmatprep.subr.mxu0 0.0
    %462 = vmatpush2.msra.mxu0 0.0
    %463 = vmatprep.subr.mxu0 0.0
    %464 = vmatpush2.msra.mxu0 0.0
    %465 = vmatprep.subr.mxu0 0.0
    %466 = vmatpush2.msra.mxu0 0.0
    %467 = vmatprep.subr.mxu0 0.0
    %468 = vmatpush2.msra.mxu0 0.0
    %469 = vmatprep.subr.mxu0 0.0
    %470 = vmatpush2.msra.mxu0 0.0
    %471 = vmatprep.subr.mxu0 0.0
    %472 = vmatpush2.msra.mxu0 0.0
    %473 = vmatprep.subr.mxu0 0.0
    %474 = vmatpush2.msra.mxu0 0.0
    %475 = vmatprep.subr.mxu0 0.0
    %476 = vmatpush2.msra.mxu0 0.0
    %477 = vmatprep.subr.mxu0 0.0
    %478 = vmatpush2.msra.mxu0 0.0
    %479 = vmatprep.subr.mxu0 0.0
    %480 = vmatpush2.msra.mxu0 0.0
    %481 = vmatprep.mubr.f32.mxu0 0.0
    %482 = vmatmul.mubr.f32.gmra.mxu0 %v412
    %v483 = vpop.f32.mrf.mxu0
    %v484 = vadd.f32 0.0, %v483
    %v485 = vpop.f32.mrf.mxu0
    %486 = vmatprep.mubr.f32.mxu0 0.0
    %487 = vmatmul.mubr.f32.gmra.mxu0 %v415
    %v488 = vpop.f32.mrf.mxu0
    %v489 = vadd.f32 0.0, %v488
    %v490 = vpop.f32.mrf.mxu0
    %491 = vdwg.mxu0
    %492 = vrot.lane.b32.xlu0 %v282, 120
    %v493 = vpop.permute.xlu0 %492
    %494 = vrot.lane.b32.xlu0 %v283, 120
    %v495 = vpop.permute.xlu0 %494
    %v496 = vsel %vm292, %v493, 0
    %v498 = vsel %vm292, %v495, 0
    %500 = vmatprep.subr.mxu0 0.0
    %501 = vmatpush1.xpose.msra.mxu0 0.0
    %502 = vmatprep.subr.mxu0 0.0
    %503 = vmatpush1.xpose.msra.mxu0 0.0
    %504 = vmatprep.subr.mxu0 0.0
    %505 = vmatpush1.xpose.msra.mxu0 0.0
    %506 = vmatprep.subr.mxu0 0.0
    %507 = vmatpush1.xpose.msra.mxu0 0.0
    %508 = vmatprep.subr.mxu0 0.0
    %509 = vmatpush1.xpose.msra.mxu0 0.0
    %510 = vmatprep.subr.mxu0 0.0
    %511 = vmatpush1.xpose.msra.mxu0 0.0
    %512 = vmatprep.subr.mxu0 0.0
    %513 = vmatpush1.xpose.msra.mxu0 0.0
    %514 = vmatprep.subr.mxu0 0.0
    %515 = vmatpush1.xpose.msra.mxu0 0.0
    %516 = vmatprep.subr.mxu0 0.0
    %517 = vmatpush1.xpose.msra.mxu0 0.0
    %518 = vmatprep.subr.mxu0 0.0
    %519 = vmatpush1.xpose.msra.mxu0 0.0
    %520 = vmatprep.subr.mxu0 0.0
    %521 = vmatpush1.xpose.msra.mxu0 0.0
    %522 = vmatprep.subr.mxu0 0.0
    %523 = vmatpush1.xpose.msra.mxu0 0.0
    %524 = vmatprep.subr.mxu0 0.0
    %525 = vmatpush1.xpose.msra.mxu0 0.0
    %526 = vmatprep.subr.mxu0 0.0
    %527 = vmatpush1.xpose.msra.mxu0 0.0
    %528 = vmatprep.subr.mxu0 0.0
    %529 = vmatpush1.xpose.msra.mxu0 %v299
    %530 = vmatprep.subr.mxu0 0.0
    %531 = vmatpush1.xpose.msra.mxu0 %v297
    %532 = vmatprep.subr.mxu0 0.0
    %533 = vmatpush2.xpose.msra.mxu0 0.0
    %534 = vmatprep.subr.mxu0 0.0
    %535 = vmatpush2.xpose.msra.mxu0 0.0
    %536 = vmatprep.subr.mxu0 0.0
    %537 = vmatpush2.xpose.msra.mxu0 0.0
    %538 = vmatprep.subr.mxu0 0.0
    %539 = vmatpush2.xpose.msra.mxu0 0.0
    %540 = vmatprep.subr.mxu0 0.0
    %541 = vmatpush2.xpose.msra.mxu0 0.0
    %542 = vmatprep.subr.mxu0 0.0
    %543 = vmatpush2.xpose.msra.mxu0 0.0
    %544 = vmatprep.subr.mxu0 0.0
    %545 = vmatpush2.xpose.msra.mxu0 0.0
    %546 = vmatprep.subr.mxu0 0.0
    %547 = vmatpush2.xpose.msra.mxu0 0.0
    %548 = vmatprep.subr.mxu0 0.0
    %549 = vmatpush2.xpose.msra.mxu0 0.0
    %550 = vmatprep.subr.mxu0 0.0
    %551 = vmatpush2.xpose.msra.mxu0 0.0
    %552 = vmatprep.subr.mxu0 0.0
    %553 = vmatpush2.xpose.msra.mxu0 0.0
    %554 = vmatprep.subr.mxu0 0.0
    %555 = vmatpush2.xpose.msra.mxu0 0.0
    %556 = vmatprep.subr.mxu0 0.0
    %557 = vmatpush2.xpose.msra.mxu0 0.0
    %558 = vmatprep.subr.mxu0 0.0
    %559 = vmatpush2.xpose.msra.mxu0 0.0
    %560 = vmatprep.subr.mxu0 0.0
    %561 = vmatpush2.xpose.msra.mxu0 0.0
    %562 = vmatprep.subr.mxu0 0.0
    %563 = vmatpush2.xpose.msra.mxu0 0.0
    %564 = vmatprep.mubr.f32.mxu0 0.0
    %565 = vmatmul.mubr.f32.gmra.mxu0 %v496
    %v566 = vpop.f32.mrf.mxu0
    %v567 = vadd.f32 0.0, %v566
    %v568 = vpop.f32.mrf.mxu0
    %569 = vmatprep.mubr.f32.mxu0 0.0
    %570 = vmatmul.mubr.f32.gmra.mxu0 %v498
    %v571 = vpop.f32.mrf.mxu0
    %v572 = vadd.f32 0.0, %v571
    %v573 = vpop.f32.mrf.mxu0
    %574 = vdwg.mxu0
    %v575 = vmul.f32 %v567, 0.35355338
    %v576 = vmul.f32 %v572, 0.35355338
    %v577 = vadd.f32 %v575, %v284
    %v578 = vadd.f32 %v576, %v285
    %v579 = vsel %vm380, %v577, -inf
    %580 = vmax.xlane.f32.xlu0 %v579
    %v581 = vpop.xlane.xlu0 %580
    %v582 = vsel %vm380, %v578, -inf
    %583 = vmax.xlane.f32.xlu0 %v582
    %v584 = vpop.xlane.xlu0 %583
    %v585 = vsub.f32 %v577, %v581
    %v586 = vsub.f32 %v578, %v584
    %v587 = vmul.f32 %v585, 1.442695
    %v588 = vpow.pop %v587
    %v589 = vmul.f32 %v586, 1.442695
    %v590 = vpow.pop %v589
    %v591 = vsel %vm380, %v588, 0.0
    %592 = vadd.xlane.f32.xlu0 %v591
    %v593 = vpop.xlane.xlu0 %592
    %v594 = vsel %vm380, %v590, 0.0
    %595 = vadd.xlane.f32.xlu0 %v594
    %v596 = vpop.xlane.xlu0 %595
    %v597 = vrcp.pop %v593
    %v598 = vrcp.pop %v596
    %v599 = vmul.f32 %v588, %v597
    %v600 = vmul.f32 %v590, %v598
    %v602 = vsel %vm380, %v599, 0
    %v605 = vsel %vm380, %v600, 0
    %607 = vmatprep.subr.mxu0 0.0
    %608 = vmatpush1.msra.mxu0 0.0
    %609 = vmatprep.subr.mxu0 0.0
    %610 = vmatpush1.msra.mxu0 0.0
    %611 = vmatprep.subr.mxu0 0.0
    %612 = vmatpush1.msra.mxu0 0.0
    %613 = vmatprep.subr.mxu0 0.0
    %614 = vmatpush1.msra.mxu0 0.0
    %615 = vmatprep.subr.mxu0 0.0
    %616 = vmatpush1.msra.mxu0 0.0
    %617 = vmatprep.subr.mxu0 0.0
    %618 = vmatpush1.msra.mxu0 0.0
    %619 = vmatprep.subr.mxu0 0.0
    %620 = vmatpush1.msra.mxu0 0.0
    %621 = vmatprep.subr.mxu0 0.0
    %622 = vmatpush1.msra.mxu0 0.0
    %623 = vmatprep.subr.mxu0 0.0
    %624 = vmatpush1.msra.mxu0 0.0
    %625 = vmatprep.subr.mxu0 0.0
    %626 = vmatpush1.msra.mxu0 0.0
    %627 = vmatprep.subr.mxu0 0.0
    %628 = vmatpush1.msra.mxu0 0.0
    %629 = vmatprep.subr.mxu0 0.0
    %630 = vmatpush1.msra.mxu0 0.0
    %631 = vmatprep.subr.mxu0 0.0
    %632 = vmatpush1.msra.mxu0 0.0
    %633 = vmatprep.subr.mxu0 0.0
    %634 = vmatpush1.msra.mxu0 0.0
    %635 = vmatprep.subr.mxu0 0.0
    %636 = vmatpush1.msra.mxu0 %v408
    %637 = vmatprep.subr.mxu0 0.0
    %638 = vmatpush1.msra.mxu0 %v406
    %639 = vmatprep.subr.mxu0 0.0
    %640 = vmatpush2.msra.mxu0 0.0
    %641 = vmatprep.subr.mxu0 0.0
    %642 = vmatpush2.msra.mxu0 0.0
    %643 = vmatprep.subr.mxu0 0.0
    %644 = vmatpush2.msra.mxu0 0.0
    %645 = vmatprep.subr.mxu0 0.0
    %646 = vmatpush2.msra.mxu0 0.0
    %647 = vmatprep.subr.mxu0 0.0
    %648 = vmatpush2.msra.mxu0 0.0
    %649 = vmatprep.subr.mxu0 0.0
    %650 = vmatpush2.msra.mxu0 0.0
    %651 = vmatprep.subr.mxu0 0.0
    %652 = vmatpush2.msra.mxu0 0.0
    %653 = vmatprep.subr.mxu0 0.0
    %654 = vmatpush2.msra.mxu0 0.0
    %655 = vmatprep.subr.mxu0 0.0
    %656 = vmatpush2.msra.mxu0 0.0
    %657 = vmatprep.subr.mxu0 0.0
    %658 = vmatpush2.msra.mxu0 0.0
    %659 = vmatprep.subr.mxu0 0.0
    %660 = vmatpush2.msra.mxu0 0.0
    %661 = vmatprep.subr.mxu0 0.0
    %662 = vmatpush2.msra.mxu0 0.0
    %663 = vmatprep.subr.mxu0 0.0
    %664 = vmatpush2.msra.mxu0 0.0
    %665 = vmatprep.subr.mxu0 0.0
    %666 = vmatpush2.msra.mxu0 0.0
    %667 = vmatprep.subr.mxu0 0.0
    %668 = vmatpush2.msra.mxu0 0.0
    %669 = vmatprep.subr.mxu0 0.0
    %670 = vmatpush2.msra.mxu0 0.0
    %671 = vmatprep.mubr.f32.mxu0 0.0
    %672 = vmatmul.mubr.f32.gmra.mxu0 %v602
    %v673 = vpop.f32.mrf.mxu0
    %v674 = vadd.f32 0.0, %v673
    %v675 = vpop.f32.mrf.mxu0
    %676 = vmatprep.mubr.f32.mxu0 0.0
    %677 = vmatmul.mubr.f32.gmra.mxu0 %v605
    %v678 = vpop.f32.mrf.mxu0
    %v679 = vadd.f32 0.0, %v678
    %v680 = vpop.f32.mrf.mxu0
    %681 = vdwg.mxu0
    %682 = vrot.lane.b32.xlu0 %v282, 112
    %v683 = vpop.permute.xlu0 %682
    %684 = vrot.lane.b32.xlu0 %v283, 112
    %v685 = vpop.permute.xlu0 %684
    %686 = vrot.lane.b32.xlu0 %v282, 88
    %v687 = vpop.permute.xlu0 %686
    %688 = vrot.lane.b32.xlu0 %v283, 88
    %v689 = vpop.permute.xlu0 %688
    %v690 = vsel %vm292, %v683, 0
    %v692 = vsel %vm292, %v685, 0
    %v694 = vsel %vm292, %v687, 0
    %v696 = vsel %vm292, %v689, 0
    %698 = vmatprep.subr.mxu0 0.0
    %699 = vmatpush1.xpose.msra.mxu0 0.0
    %700 = vmatprep.subr.mxu0 0.0
    %701 = vmatpush1.xpose.msra.mxu0 0.0
    %702 = vmatprep.subr.mxu0 0.0
    %703 = vmatpush1.xpose.msra.mxu0 0.0
    %704 = vmatprep.subr.mxu0 0.0
    %705 = vmatpush1.xpose.msra.mxu0 0.0
    %706 = vmatprep.subr.mxu0 0.0
    %707 = vmatpush1.xpose.msra.mxu0 0.0
    %708 = vmatprep.subr.mxu0 0.0
    %709 = vmatpush1.xpose.msra.mxu0 0.0
    %710 = vmatprep.subr.mxu0 0.0
    %711 = vmatpush1.xpose.msra.mxu0 0.0
    %712 = vmatprep.subr.mxu0 0.0
    %713 = vmatpush1.xpose.msra.mxu0 0.0
    %714 = vmatprep.subr.mxu0 0.0
    %715 = vmatpush1.xpose.msra.mxu0 0.0
    %716 = vmatprep.subr.mxu0 0.0
    %717 = vmatpush1.xpose.msra.mxu0 0.0
    %718 = vmatprep.subr.mxu0 0.0
    %719 = vmatpush1.xpose.msra.mxu0 0.0
    %720 = vmatprep.subr.mxu0 0.0
    %721 = vmatpush1.xpose.msra.mxu0 0.0
    %722 = vmatprep.subr.mxu0 0.0
    %723 = vmatpush1.xpose.msra.mxu0 0.0
    %724 = vmatprep.subr.mxu0 0.0
    %725 = vmatpush1.xpose.msra.mxu0 0.0
    %726 = vmatprep.subr.mxu0 0.0
    %727 = vmatpush1.xpose.msra.mxu0 %v696
    %728 = vmatprep.subr.mxu0 0.0
    %729 = vmatpush1.xpose.msra.mxu0 %v694
    %730 = vmatprep.subr.mxu0 0.0
    %731 = vmatpush2.xpose.msra.mxu0 0.0
    %732 = vmatprep.subr.mxu0 0.0
    %733 = vmatpush2.xpose.msra.mxu0 0.0
    %734 = vmatprep.subr.mxu0 0.0
    %735 = vmatpush2.xpose.msra.mxu0 0.0
    %736 = vmatprep.subr.mxu0 0.0
    %737 = vmatpush2.xpose.msra.mxu0 0.0
    %738 = vmatprep.subr.mxu0 0.0
    %739 = vmatpush2.xpose.msra.mxu0 0.0
    %740 = vmatprep.subr.mxu0 0.0
    %741 = vmatpush2.xpose.msra.mxu0 0.0
    %742 = vmatprep.subr.mxu0 0.0
    %743 = vmatpush2.xpose.msra.mxu0 0.0
    %744 = vmatprep.subr.mxu0 0.0
    %745 = vmatpush2.xpose.msra.mxu0 0.0
    %746 = vmatprep.subr.mxu0 0.0
    %747 = vmatpush2.xpose.msra.mxu0 0.0
    %748 = vmatprep.subr.mxu0 0.0
    %749 = vmatpush2.xpose.msra.mxu0 0.0
    %750 = vmatprep.subr.mxu0 0.0
    %751 = vmatpush2.xpose.msra.mxu0 0.0
    %752 = vmatprep.subr.mxu0 0.0
    %753 = vmatpush2.xpose.msra.mxu0 0.0
    %754 = vmatprep.subr.mxu0 0.0
    %755 = vmatpush2.xpose.msra.mxu0 0.0
    %756 = vmatprep.subr.mxu0 0.0
    %757 = vmatpush2.xpose.msra.mxu0 0.0
    %758 = vmatprep.subr.mxu0 0.0
    %759 = vmatpush2.xpose.msra.mxu0 0.0
    %760 = vmatprep.subr.mxu0 0.0
    %761 = vmatpush2.xpose.msra.mxu0 0.0
    %762 = vmatprep.mubr.f32.mxu0 0.0
    %763 = vmatmul.mubr.f32.gmra.mxu0 %v690
    %v764 = vpop.f32.mrf.mxu0
    %v765 = vadd.f32 0.0, %v764
    %v766 = vpop.f32.mrf.mxu0
    %767 = vmatprep.mubr.f32.mxu0 0.0
    %768 = vmatmul.mubr.f32.gmra.mxu0 %v692
    %v769 = vpop.f32.mrf.mxu0
    %v770 = vadd.f32 0.0, %v769
    %v771 = vpop.f32.mrf.mxu0
    %772 = vdwg.mxu0
    %v773 = vmul.f32 %v765, 0.35355338
    %v774 = vmul.f32 %v770, 0.35355338
    %v775 = vadd.f32 %v773, %v284
    %v776 = vadd.f32 %v774, %v285
    %v777 = vsel %vm380, %v775, -inf
    %778 = vmax.xlane.f32.xlu0 %v777
    %v779 = vpop.xlane.xlu0 %778
    %v780 = vsel %vm380, %v776, -inf
    %781 = vmax.xlane.f32.xlu0 %v780
    %v782 = vpop.xlane.xlu0 %781
    %v783 = vsub.f32 %v775, %v779
    %v784 = vsub.f32 %v776, %v782
    %v785 = vmul.f32 %v783, 1.442695
    %v786 = vpow.pop %v785
    %v787 = vmul.f32 %v784, 1.442695
    %v788 = vpow.pop %v787
    %v789 = vsel %vm380, %v786, 0.0
    %790 = vadd.xlane.f32.xlu0 %v789
    %v791 = vpop.xlane.xlu0 %790
    %v792 = vsel %vm380, %v788, 0.0
    %793 = vadd.xlane.f32.xlu0 %v792
    %v794 = vpop.xlane.xlu0 %793
    %v795 = vrcp.pop %v791
    %v796 = vrcp.pop %v794
    %v797 = vmul.f32 %v786, %v795
    %v798 = vmul.f32 %v788, %v796
    %799 = vrot.lane.b32.xlu0 %v173, 72
    %v800 = vpop.permute.xlu0 %799
    %801 = vrot.lane.b32.xlu0 %v178, 72
    %v802 = vpop.permute.xlu0 %801
    %v806 = vsel %vm380, %v797, 0
    %v809 = vsel %vm380, %v798, 0
    %811 = vmatprep.subr.mxu0 0.0
    %812 = vmatpush1.msra.mxu0 0.0
    %813 = vmatprep.subr.mxu0 0.0
    %814 = vmatpush1.msra.mxu0 0.0
    %815 = vmatprep.subr.mxu0 0.0
    %816 = vmatpush1.msra.mxu0 0.0
    %817 = vmatprep.subr.mxu0 0.0
    %818 = vmatpush1.msra.mxu0 0.0
    %819 = vmatprep.subr.mxu0 0.0
    %820 = vmatpush1.msra.mxu0 0.0
    %821 = vmatprep.subr.mxu0 0.0
    %822 = vmatpush1.msra.mxu0 0.0
    %823 = vmatprep.subr.mxu0 0.0
    %824 = vmatpush1.msra.mxu0 0.0
    %825 = vmatprep.subr.mxu0 0.0
    %826 = vmatpush1.msra.mxu0 0.0
    %827 = vmatprep.subr.mxu0 0.0
    %828 = vmatpush1.msra.mxu0 0.0
    %829 = vmatprep.subr.mxu0 0.0
    %830 = vmatpush1.msra.mxu0 0.0
    %831 = vmatprep.subr.mxu0 0.0
    %832 = vmatpush1.msra.mxu0 0.0
    %833 = vmatprep.subr.mxu0 0.0
    %834 = vmatpush1.msra.mxu0 0.0
    %835 = vmatprep.subr.mxu0 0.0
    %836 = vmatpush1.msra.mxu0 0.0
    %837 = vmatprep.subr.mxu0 0.0
    %838 = vmatpush1.msra.mxu0 0.0
    %839 = vmatprep.subr.mxu0 0.0
    %840 = vmatpush1.msra.mxu0 %v802
    %841 = vmatprep.subr.mxu0 0.0
    %842 = vmatpush1.msra.mxu0 %v800
    %843 = vmatprep.subr.mxu0 0.0
    %844 = vmatpush2.msra.mxu0 0.0
    %845 = vmatprep.subr.mxu0 0.0
    %846 = vmatpush2.msra.mxu0 0.0
    %847 = vmatprep.subr.mxu0 0.0
    %848 = vmatpush2.msra.mxu0 0.0
    %849 = vmatprep.subr.mxu0 0.0
    %850 = vmatpush2.msra.mxu0 0.0
    %851 = vmatprep.subr.mxu0 0.0
    %852 = vmatpush2.msra.mxu0 0.0
    %853 = vmatprep.subr.mxu0 0.0
    %854 = vmatpush2.msra.mxu0 0.0
    %855 = vmatprep.subr.mxu0 0.0
    %856 = vmatpush2.msra.mxu0 0.0
    %857 = vmatprep.subr.mxu0 0.0
    %858 = vmatpush2.msra.mxu0 0.0
    %859 = vmatprep.subr.mxu0 0.0
    %860 = vmatpush2.msra.mxu0 0.0
    %861 = vmatprep.subr.mxu0 0.0
    %862 = vmatpush2.msra.mxu0 0.0
    %863 = vmatprep.subr.mxu0 0.0
    %864 = vmatpush2.msra.mxu0 0.0
    %865 = vmatprep.subr.mxu0 0.0
    %866 = vmatpush2.msra.mxu0 0.0
    %867 = vmatprep.subr.mxu0 0.0
    %868 = vmatpush2.msra.mxu0 0.0
    %869 = vmatprep.subr.mxu0 0.0
    %870 = vmatpush2.msra.mxu0 0.0
    %871 = vmatprep.subr.mxu0 0.0
    %872 = vmatpush2.msra.mxu0 0.0
    %873 = vmatprep.subr.mxu0 0.0
    %874 = vmatpush2.msra.mxu0 0.0
    %875 = vmatprep.mubr.f32.mxu0 0.0
    %876 = vmatmul.mubr.f32.gmra.mxu0 %v806
    %v877 = vpop.f32.mrf.mxu0
    %v878 = vadd.f32 0.0, %v877
    %v879 = vpop.f32.mrf.mxu0
    %880 = vmatprep.mubr.f32.mxu0 0.0
    %881 = vmatmul.mubr.f32.gmra.mxu0 %v809
    %v882 = vpop.f32.mrf.mxu0
    %v883 = vadd.f32 0.0, %v882
    %v884 = vpop.f32.mrf.mxu0
    %885 = vdwg.mxu0
    %886 = vrot.lane.b32.xlu0 %v282, 104
    %v887 = vpop.permute.xlu0 %886
    %888 = vrot.lane.b32.xlu0 %v283, 104
    %v889 = vpop.permute.xlu0 %888
    %v890 = vsel %vm292, %v887, 0
    %v892 = vsel %vm292, %v889, 0
    %894 = vmatprep.subr.mxu0 0.0
    %895 = vmatpush1.xpose.msra.mxu0 0.0
    %896 = vmatprep.subr.mxu0 0.0
    %897 = vmatpush1.xpose.msra.mxu0 0.0
    %898 = vmatprep.subr.mxu0 0.0
    %899 = vmatpush1.xpose.msra.mxu0 0.0
    %900 = vmatprep.subr.mxu0 0.0
    %901 = vmatpush1.xpose.msra.mxu0 0.0
    %902 = vmatprep.subr.mxu0 0.0
    %903 = vmatpush1.xpose.msra.mxu0 0.0
    %904 = vmatprep.subr.mxu0 0.0
    %905 = vmatpush1.xpose.msra.mxu0 0.0
    %906 = vmatprep.subr.mxu0 0.0
    %907 = vmatpush1.xpose.msra.mxu0 0.0
    %908 = vmatprep.subr.mxu0 0.0
    %909 = vmatpush1.xpose.msra.mxu0 0.0
    %910 = vmatprep.subr.mxu0 0.0
    %911 = vmatpush1.xpose.msra.mxu0 0.0
    %912 = vmatprep.subr.mxu0 0.0
    %913 = vmatpush1.xpose.msra.mxu0 0.0
    %914 = vmatprep.subr.mxu0 0.0
    %915 = vmatpush1.xpose.msra.mxu0 0.0
    %916 = vmatprep.subr.mxu0 0.0
    %917 = vmatpush1.xpose.msra.mxu0 0.0
    %918 = vmatprep.subr.mxu0 0.0
    %919 = vmatpush1.xpose.msra.mxu0 0.0
    %920 = vmatprep.subr.mxu0 0.0
    %921 = vmatpush1.xpose.msra.mxu0 0.0
    %922 = vmatprep.subr.mxu0 0.0
    %923 = vmatpush1.xpose.msra.mxu0 %v696
    %924 = vmatprep.subr.mxu0 0.0
    %925 = vmatpush1.xpose.msra.mxu0 %v694
    %926 = vmatprep.subr.mxu0 0.0
    %927 = vmatpush2.xpose.msra.mxu0 0.0
    %928 = vmatprep.subr.mxu0 0.0
    %929 = vmatpush2.xpose.msra.mxu0 0.0
    %930 = vmatprep.subr.mxu0 0.0
    %931 = vmatpush2.xpose.msra.mxu0 0.0
    %932 = vmatprep.subr.mxu0 0.0
    %933 = vmatpush2.xpose.msra.mxu0 0.0
    %934 = vmatprep.subr.mxu0 0.0
    %935 = vmatpush2.xpose.msra.mxu0 0.0
    %936 = vmatprep.subr.mxu0 0.0
    %937 = vmatpush2.xpose.msra.mxu0 0.0
    %938 = vmatprep.subr.mxu0 0.0
    %939 = vmatpush2.xpose.msra.mxu0 0.0
    %940 = vmatprep.subr.mxu0 0.0
    %941 = vmatpush2.xpose.msra.mxu0 0.0
    %942 = vmatprep.subr.mxu0 0.0
    %943 = vmatpush2.xpose.msra.mxu0 0.0
    %944 = vmatprep.subr.mxu0 0.0
    %945 = vmatpush2.xpose.msra.mxu0 0.0
    %946 = vmatprep.subr.mxu0 0.0
    %947 = vmatpush2.xpose.msra.mxu0 0.0
    %948 = vmatprep.subr.mxu0 0.0
    %949 = vmatpush2.xpose.msra.mxu0 0.0
    %950 = vmatprep.subr.mxu0 0.0
    %951 = vmatpush2.xpose.msra.mxu0 0.0
    %952 = vmatprep.subr.mxu0 0.0
    %953 = vmatpush2.xpose.msra.mxu0 0.0
    %954 = vmatprep.subr.mxu0 0.0
    %955 = vmatpush2.xpose.msra.mxu0 0.0
    %956 = vmatprep.subr.mxu0 0.0
    %957 = vmatpush2.xpose.msra.mxu0 0.0
    %958 = vmatprep.mubr.f32.mxu0 0.0
    %959 = vmatmul.mubr.f32.gmra.mxu0 %v890
    %v960 = vpop.f32.mrf.mxu0
    %v961 = vadd.f32 0.0, %v960
    %v962 = vpop.f32.mrf.mxu0
    %963 = vmatprep.mubr.f32.mxu0 0.0
    %964 = vmatmul.mubr.f32.gmra.mxu0 %v892
    %v965 = vpop.f32.mrf.mxu0
    %v966 = vadd.f32 0.0, %v965
    %v967 = vpop.f32.mrf.mxu0
    %968 = vdwg.mxu0
    %v969 = vmul.f32 %v961, 0.35355338
    %v970 = vmul.f32 %v966, 0.35355338
    %v971 = vadd.f32 %v969, %v284
    %v972 = vadd.f32 %v970, %v285
    %v973 = vsel %vm380, %v971, -inf
    %974 = vmax.xlane.f32.xlu0 %v973
    %v975 = vpop.xlane.xlu0 %974
    %v976 = vsel %vm380, %v972, -inf
    %977 = vmax.xlane.f32.xlu0 %v976
    %v978 = vpop.xlane.xlu0 %977
    %v979 = vsub.f32 %v971, %v975
    %v980 = vsub.f32 %v972, %v978
    %v981 = vmul.f32 %v979, 1.442695
    %v982 = vpow.pop %v981
    %v983 = vmul.f32 %v980, 1.442695
    %v984 = vpow.pop %v983
    %v985 = vsel %vm380, %v982, 0.0
    %986 = vadd.xlane.f32.xlu0 %v985
    %v987 = vpop.xlane.xlu0 %986
    %v988 = vsel %vm380, %v984, 0.0
    %989 = vadd.xlane.f32.xlu0 %v988
    %v990 = vpop.xlane.xlu0 %989
    %v991 = vrcp.pop %v987
    %v992 = vrcp.pop %v990
    %v993 = vmul.f32 %v982, %v991
    %v994 = vmul.f32 %v984, %v992
    %v996 = vsel %vm380, %v993, 0
    %v999 = vsel %vm380, %v994, 0
    %1001 = vmatprep.subr.mxu0 0.0
    %1002 = vmatpush1.msra.mxu0 0.0
    %1003 = vmatprep.subr.mxu0 0.0
    %1004 = vmatpush1.msra.mxu0 0.0
    %1005 = vmatprep.subr.mxu0 0.0
    %1006 = vmatpush1.msra.mxu0 0.0
    %1007 = vmatprep.subr.mxu0 0.0
    %1008 = vmatpush1.msra.mxu0 0.0
    %1009 = vmatprep.subr.mxu0 0.0
    %1010 = vmatpush1.msra.mxu0 0.0
    %1011 = vmatprep.subr.mxu0 0.0
    %1012 = vmatpush1.msra.mxu0 0.0
    %1013 = vmatprep.subr.mxu0 0.0
    %1014 = vmatpush1.msra.mxu0 0.0
    %1015 = vmatprep.subr.mxu0 0.0
    %1016 = vmatpush1.msra.mxu0 0.0
    %1017 = vmatprep.subr.mxu0 0.0
    %1018 = vmatpush1.msra.mxu0 0.0
    %1019 = vmatprep.subr.mxu0 0.0
    %1020 = vmatpush1.msra.mxu0 0.0
    %1021 = vmatprep.subr.mxu0 0.0
    %1022 = vmatpush1.msra.mxu0 0.0
    %1023 = vmatprep.subr.mxu0 0.0
    %1024 = vmatpush1.msra.mxu0 0.0
    %1025 = vmatprep.subr.mxu0 0.0
    %1026 = vmatpush1.msra.mxu0 0.0
    %1027 = vmatprep.subr.mxu0 0.0
    %1028 = vmatpush1.msra.mxu0 0.0
    %1029 = vmatprep.subr.mxu0 0.0
    %1030 = vmatpush1.msra.mxu0 %v802
    %1031 = vmatprep.subr.mxu0 0.0
    %1032 = vmatpush1.msra.mxu0 %v800
    %1033 = vmatprep.subr.mxu0 0.0
    %1034 = vmatpush2.msra.mxu0 0.0
    %1035 = vmatprep.subr.mxu0 0.0
    %1036 = vmatpush2.msra.mxu0 0.0
    %1037 = vmatprep.subr.mxu0 0.0
    %1038 = vmatpush2.msra.mxu0 0.0
    %1039 = vmatprep.subr.mxu0 0.0
    %1040 = vmatpush2.msra.mxu0 0.0
    %1041 = vmatprep.subr.mxu0 0.0
    %1042 = vmatpush2.msra.mxu0 0.0
    %1043 = vmatprep.subr.mxu0 0.0
    %1044 = vmatpush2.msra.mxu0 0.0
    %1045 = vmatprep.subr.mxu0 0.0
    %1046 = vmatpush2.msra.mxu0 0.0
    %1047 = vmatprep.subr.mxu0 0.0
    %1048 = vmatpush2.msra.mxu0 0.0
    %1049 = vmatprep.subr.mxu0 0.0
    %1050 = vmatpush2.msra.mxu0 0.0
    %1051 = vmatprep.subr.mxu0 0.0
    %1052 = vmatpush2.msra.mxu0 0.0
    %1053 = vmatprep.subr.mxu0 0.0
    %1054 = vmatpush2.msra.mxu0 0.0
    %1055 = vmatprep.subr.mxu0 0.0
    %1056 = vmatpush2.msra.mxu0 0.0
    %1057 = vmatprep.subr.mxu0 0.0
    %1058 = vmatpush2.msra.mxu0 0.0
    %1059 = vmatprep.subr.mxu0 0.0
    %1060 = vmatpush2.msra.mxu0 0.0
    %1061 = vmatprep.subr.mxu0 0.0
    %1062 = vmatpush2.msra.mxu0 0.0
    %1063 = vmatprep.subr.mxu0 0.0
    %1064 = vmatpush2.msra.mxu0 0.0
    %1065 = vmatprep.mubr.f32.mxu0 0.0
    %1066 = vmatmul.mubr.f32.gmra.mxu0 %v996
    %v1067 = vpop.f32.mrf.mxu0
    %v1068 = vadd.f32 0.0, %v1067
    %v1069 = vpop.f32.mrf.mxu0
    %1070 = vmatprep.mubr.f32.mxu0 0.0
    %1071 = vmatmul.mubr.f32.gmra.mxu0 %v999
    %v1072 = vpop.f32.mrf.mxu0
    %v1073 = vadd.f32 0.0, %v1072
    %v1074 = vpop.f32.mrf.mxu0
    %1075 = vdwg.mxu0
    %1078 = vrot.lane.b32.xlu0 %v674, 8
    %v1079 = vpop.permute.xlu0 %1078
    %1080 = vrot.lane.b32.xlu0 %v679, 8
    %v1081 = vpop.permute.xlu0 %1080
    %1086 = vrot.lane.b32.xlu0 %v878, 16
    %v1087 = vpop.permute.xlu0 %1086
    %1088 = vrot.lane.b32.xlu0 %v883, 16
    %v1089 = vpop.permute.xlu0 %1088
    %1094 = vrot.lane.b32.xlu0 %v1068, 24
    %v1095 = vpop.permute.xlu0 %1094
    %1096 = vrot.lane.b32.xlu0 %v1073, 24
    %v1097 = vpop.permute.xlu0 %1096
    %v1100 = vsel %vm292, %v484, %v1079
    %v1101 = vsel %vm292, %v489, %v1081
    %v1102 = vsel %vm380, %v1100, %v1087
    %v1103 = vsel %vm380, %v1101, %v1089
    %vm1104 = vcmask 195584
    %v1105 = vsel %vm1104, %v1102, %v1095
    %v1106 = vsel %vm1104, %v1103, %v1097
    %v1107 = vld [vmem:[#allocation5] sm:$0xff]
    %v1108 = vld [vmem:[#allocation5 + $0x8] sm:$0xff]
    %v1109 = vld [vmem:[#allocation5 + $0x10] sm:$0xff]
    %v1110 = vld [vmem:[#allocation5 + $0x18] sm:$0xff]
    %v1112 = vsel %vm72, %v1105, 0
    %v1115 = vsel %vm72, %v1106, 0
    %1117 = vmatprep.subr.mxu0 0.0
    %1118 = vmatpush1.msra.mxu0 0.0
    %1119 = vmatprep.subr.mxu0 0.0
    %1120 = vmatpush1.msra.mxu0 0.0
    %1121 = vmatprep.subr.mxu0 0.0
    %1122 = vmatpush1.msra.mxu0 0.0
    %1123 = vmatprep.subr.mxu0 0.0
    %1124 = vmatpush1.msra.mxu0 0.0
    %1125 = vmatprep.subr.mxu0 0.0
    %1126 = vmatpush1.msra.mxu0 0.0
    %1127 = vmatprep.subr.mxu0 0.0
    %1128 = vmatpush1.msra.mxu0 0.0
    %1129 = vmatprep.subr.mxu0 0.0
    %1130 = vmatpush1.msra.mxu0 0.0
    %1131 = vmatprep.subr.mxu0 0.0
    %1132 = vmatpush1.msra.mxu0 0.0
    %1133 = vmatprep.subr.mxu0 0.0
    %1134 = vmatpush1.msra.mxu0 0.0
    %1135 = vmatprep.subr.mxu0 0.0
    %1136 = vmatpush1.msra.mxu0 0.0
    %1137 = vmatprep.subr.mxu0 0.0
    %1138 = vmatpush1.msra.mxu0 0.0
    %1139 = vmatprep.subr.mxu0 0.0
    %1140 = vmatpush1.msra.mxu0 0.0
    %1141 = vmatprep.subr.mxu0 0.0
    %1142 = vmatpush1.msra.mxu0 %v1110
    %1143 = vmatprep.subr.mxu0 0.0
    %1144 = vmatpush1.msra.mxu0 %v1109
    %1145 = vmatprep.subr.mxu0 0.0
    %1146 = vmatpush1.msra.mxu0 %v1108
    %1147 = vmatprep.subr.mxu0 0.0
    %1148 = vmatpush1.msra.mxu0 %v1107
    %1149 = vmatprep.subr.mxu0 0.0
    %1150 = vmatpush2.msra.mxu0 0.0
    %1151 = vmatprep.subr.mxu0 0.0
    %1152 = vmatpush2.msra.mxu0 0.0
    %1153 = vmatprep.subr.mxu0 0.0
    %1154 = vmatpush2.msra.mxu0 0.0
    %1155 = vmatprep.subr.mxu0 0.0
    %1156 = vmatpush2.msra.mxu0 0.0
    %1157 = vmatprep.subr.mxu0 0.0
    %1158 = vmatpush2.msra.mxu0 0.0
    %1159 = vmatprep.subr.mxu0 0.0
    %1160 = vmatpush2.msra.mxu0 0.0
    %1161 = vmatprep.subr.mxu0 0.0
    %1162 = vmatpush2.msra.mxu0 0.0
    %1163 = vmatprep.subr.mxu0 0.0
    %1164 = vmatpush2.msra.mxu0 0.0
    %1165 = vmatprep.subr.mxu0 0.0
    %1166 = vmatpush2.msra.mxu0 0.0
    %1167 = vmatprep.subr.mxu0 0.0
    %1168 = vmatpush2.msra.mxu0 0.0
    %1169 = vmatprep.subr.mxu0 0.0
    %1170 = vmatpush2.msra.mxu0 0.0
    %1171 = vmatprep.subr.mxu0 0.0
    %1172 = vmatpush2.msra.mxu0 0.0
    %1173 = vmatprep.subr.mxu0 0.0
    %1174 = vmatpush2.msra.mxu0 0.0
    %1175 = vmatprep.subr.mxu0 0.0
    %1176 = vmatpush2.msra.mxu0 0.0
    %1177 = vmatprep.subr.mxu0 0.0
    %1178 = vmatpush2.msra.mxu0 0.0
    %1179 = vmatprep.subr.mxu0 0.0
    %1180 = vmatpush2.msra.mxu0 0.0
    %1181 = vmatprep.mubr.f32.mxu0 0.0
    %1182 = vmatmul.mubr.f32.gmra.mxu0 %v1112
    %v1183 = vpop.f32.mrf.mxu0
    %v1184 = vadd.f32 0.0, %v1183
    %v1185 = vpop.f32.mrf.mxu0
    %1186 = vmatprep.mubr.f32.mxu0 0.0
    %1187 = vmatmul.mubr.f32.gmra.mxu0 %v1115
    %v1188 = vpop.f32.mrf.mxu0
    %v1189 = vadd.f32 0.0, %v1188
    %v1190 = vpop.f32.mrf.mxu0
    %1191 = vdwg.mxu0
    %v1192 = vld [vmem:[%s7] sm:$0x1]
    %v1194 = vlaneseq
    %v1195 = vshrl.u32 %v1194, 7
    %v1196 = vsub.s32 0, %v1195
    %v1197 = vrot.slane %v1192, %v1196
    %v1199 = vmul.f32 %v1197, %v1184
    %v1200 = vmul.f32 %v1197, %v1189
    %v1201 = vadd.f32 %v67, %v1199
    %v1202 = vadd.f32 %v68, %v1200
    %v1203 = vld [vmem:[%s8] sm:$0x1]
    %v1204 = vmul.f32 %v1201, %v1201
    %v1205 = vmul.f32 %v1202, %v1202
    %v1206 = vsel %vm72, %v1204, 0.0
    %1207 = vadd.xlane.f32.xlu0 %v1206
    %v1208 = vpop.xlane.xlu0 %1207
    %v1209 = vsel %vm72, %v1205, 0.0
    %1210 = vadd.xlane.f32.xlu0 %v1209
    %v1211 = vpop.xlane.xlu0 %1210
    %v1212 = vmul.f32 %v1208, %v79
    %v1213 = vmul.f32 %v1211, %v79
    %v1214 = vadd.f32 %v1212, 1e-06
    %v1215 = vadd.f32 %v1213, 1e-06
    %v1216 = vrsqrt.pop %v1214
    %v1217 = vrsqrt.pop %v1215
    %v1218 = vmul.f32 %v1201, %v1216
    %v1219 = vmul.f32 %v1202, %v1217
    %v1221 = vlaneseq
    %v1222 = vshrl.u32 %v1221, 7
    %v1223 = vsub.s32 0, %v1222
    %v1224 = vrot.slane %v1203, %v1223
    %v1226 = vmul.f32 %v1218, %v1224
    %v1227 = vmul.f32 %v1219, %v1224
    %v1228 = vld [vmem:[%s9] sm:$0xff]
    %v1229 = vld [vmem:[%s9 + $0x8] sm:$0xff]
    %v1230 = vld [vmem:[%s9 + $0x10] sm:$0xff]
    %v1231 = vld [vmem:[%s9 + $0x18] sm:$0xff]
    %v1232 = vld [vmem:[%s9 + $0x20] sm:$0xff]
    %v1233 = vld [vmem:[%s9 + $0x28] sm:$0xff]
    %v1234 = vld [vmem:[%s9 + $0x30] sm:$0xff]
    %v1235 = vld [vmem:[%s9 + $0x38] sm:$0xff]
    %v1237 = vsel %vm72, %v1226, 0
    %v1240 = vsel %vm72, %v1227, 0
    %1242 = vmatprep.subr.mxu0 0.0
    %1243 = vmatpush1.msra.mxu0 0.0
    %1244 = vmatprep.subr.mxu0 0.0
    %1245 = vmatpush1.msra.mxu0 0.0
    %1246 = vmatprep.subr.mxu0 0.0
    %1247 = vmatpush1.msra.mxu0 0.0
    %1248 = vmatprep.subr.mxu0 0.0
    %1249 = vmatpush1.msra.mxu0 0.0
    %1250 = vmatprep.subr.mxu0 0.0
    %1251 = vmatpush1.msra.mxu0 0.0
    %1252 = vmatprep.subr.mxu0 0.0
    %1253 = vmatpush1.msra.mxu0 0.0
    %1254 = vmatprep.subr.mxu0 0.0
    %1255 = vmatpush1.msra.mxu0 0.0
    %1256 = vmatprep.subr.mxu0 0.0
    %1257 = vmatpush1.msra.mxu0 0.0
    %1258 = vmatprep.subr.mxu0 0.0
    %1259 = vmatpush1.msra.mxu0 0.0
    %1260 = vmatprep.subr.mxu0 0.0
    %1261 = vmatpush1.msra.mxu0 0.0
    %1262 = vmatprep.subr.mxu0 0.0
    %1263 = vmatpush1.msra.mxu0 0.0
    %1264 = vmatprep.subr.mxu0 0.0
    %1265 = vmatpush1.msra.mxu0 0.0
    %1266 = vmatprep.subr.mxu0 %v1235
    %1267 = vmatpush1.msra.mxu0 %v1234
    %1268 = vmatprep.subr.mxu0 %v1233
    %1269 = vmatpush1.msra.mxu0 %v1232
    %1270 = vmatprep.subr.mxu0 %v1231
    %1271 = vmatpush1.msra.mxu0 %v1230
    %1272 = vmatprep.subr.mxu0 %v1229
    %1273 = vmatpush1.msra.mxu0 %v1228
    %1274 = vmatprep.subr.mxu0 0.0
    %1275 = vmatpush2.msra.mxu0 0.0
    %1276 = vmatprep.subr.mxu0 0.0
    %1277 = vmatpush2.msra.mxu0 0.0
    %1278 = vmatprep.subr.mxu0 0.0
    %1279 = vmatpush2.msra.mxu0 0.0
    %1280 = vmatprep.subr.mxu0 0.0
    %1281 = vmatpush2.msra.mxu0 0.0
    %1282 = vmatprep.subr.mxu0 0.0
    %1283 = vmatpush2.msra.mxu0 0.0
    %1284 = vmatprep.subr.mxu0 0.0
    %1285 = vmatpush2.msra.mxu0 0.0
    %1286 = vmatprep.subr.mxu0 0.0
    %1287 = vmatpush2.msra.mxu0 0.0
    %1288 = vmatprep.subr.mxu0 0.0
    %1289 = vmatpush2.msra.mxu0 0.0
    %1290 = vmatprep.subr.mxu0 0.0
    %1291 = vmatpush2.msra.mxu0 0.0
    %1292 = vmatprep.subr.mxu0 0.0
    %1293 = vmatpush2.msra.mxu0 0.0
    %1294 = vmatprep.subr.mxu0 0.0
    %1295 = vmatpush2.msra.mxu0 0.0
    %1296 = vmatprep.subr.mxu0 0.0
    %1297 = vmatpush2.msra.mxu0 0.0
    %1298 = vmatprep.subr.mxu0 0.0
    %1299 = vmatpush2.msra.mxu0 0.0
    %1300 = vmatprep.subr.mxu0 0.0
    %1301 = vmatpush2.msra.mxu0 0.0
    %1302 = vmatprep.subr.mxu0 0.0
    %1303 = vmatpush2.msra.mxu0 0.0
    %1304 = vmatprep.subr.mxu0 0.0
    %1305 = vmatpush2.msra.mxu0 0.0
    %1306 = vmatprep.mubr.f32.mxu0 0.0
    %1307 = vmatmul.mubr.f32.gmra.mxu0 %v1237
    %v1308 = vpop.f32.mrf.mxu0
    %v1309 = vadd.f32 0.0, %v1308
    %v1310 = vpop.f32.mrf.mxu0
    %v1311 = vadd.f32 0.0, %v1310
    %1312 = vmatprep.mubr.f32.mxu0 0.0
    %1313 = vmatmul.mubr.f32.gmra.mxu0 %v1240
    %v1314 = vpop.f32.mrf.mxu0
    %v1315 = vadd.f32 0.0, %v1314
    %v1316 = vpop.f32.mrf.mxu0
    %v1317 = vadd.f32 0.0, %v1316
    %1318 = vdwg.mxu0
    %v1319 = vxor.u32 %v1309, 2147483648
    %v1320 = vxor.u32 %v1315, 2147483648
    %v1321 = vmul.f32 %v1319, 1.442695
    %v1322 = vpow.pop %v1321
    %v1323 = vmul.f32 %v1320, 1.442695
    %v1324 = vpow.pop %v1323
    %v1325 = vadd.f32 %v1322, 1.0
    %v1326 = vadd.f32 %v1324, 1.0
    %v1327 = vrcp.pop %v1325
    %v1328 = vmul.f32 1.0, %v1327
    %v1329 = vrcp.pop %v1326
    %v1330 = vmul.f32 1.0, %v1329
    %v1331 = vmul.f32 %v1309, %v1328
    %v1332 = vmul.f32 %v1315, %v1330
    %v1333 = vmul.f32 %v1331, %v1311
    %v1334 = vmul.f32 %v1332, %v1317
    %v1335 = vld [vmem:[%s10] sm:$0xff]
    %v1336 = vld [vmem:[%s10 + $0x8] sm:$0xff]
    %v1337 = vld [vmem:[%s10 + $0x10] sm:$0xff]
    %v1338 = vld [vmem:[%s10 + $0x18] sm:$0xff]
    %v1339 = vld [vmem:[%s10 + $0x20] sm:$0xff]
    %v1340 = vld [vmem:[%s10 + $0x28] sm:$0xff]
    %v1341 = vld [vmem:[%s10 + $0x30] sm:$0xff]
    %v1342 = vld [vmem:[%s10 + $0x38] sm:$0xff]
    %v1343 = vld [vmem:[%s10 + $0x40] sm:$0xff]
    %v1344 = vld [vmem:[%s10 + $0x48] sm:$0xff]
    %v1345 = vld [vmem:[%s10 + $0x50] sm:$0xff]
    %v1346 = vld [vmem:[%s10 + $0x58] sm:$0xff]
    %v1347 = vld [vmem:[%s10 + $0x60] sm:$0xff]
    %v1348 = vld [vmem:[%s10 + $0x68] sm:$0xff]
    %v1349 = vld [vmem:[%s10 + $0x70] sm:$0xff]
    %v1350 = vld [vmem:[%s10 + $0x78] sm:$0xff]
    %1351 = vmatprep.subr.mxu0 0.0
    %1352 = vmatpush1.msra.mxu0 %v1350
    %1353 = vmatprep.subr.mxu0 0.0
    %1354 = vmatpush1.msra.mxu0 %v1349
    %1355 = vmatprep.subr.mxu0 0.0
    %1356 = vmatpush1.msra.mxu0 %v1348
    %1357 = vmatprep.subr.mxu0 0.0
    %1358 = vmatpush1.msra.mxu0 %v1347
    %1359 = vmatprep.subr.mxu0 0.0
    %1360 = vmatpush1.msra.mxu0 %v1346
    %1361 = vmatprep.subr.mxu0 0.0
    %1362 = vmatpush1.msra.mxu0 %v1345
    %1363 = vmatprep.subr.mxu0 0.0
    %1364 = vmatpush1.msra.mxu0 %v1344
    %1365 = vmatprep.subr.mxu0 0.0
    %1366 = vmatpush1.msra.mxu0 %v1343
    %1367 = vmatprep.subr.mxu0 0.0
    %1368 = vmatpush1.msra.mxu0 %v1342
    %1369 = vmatprep.subr.mxu0 0.0
    %1370 = vmatpush1.msra.mxu0 %v1341
    %1371 = vmatprep.subr.mxu0 0.0
    %1372 = vmatpush1.msra.mxu0 %v1340
    %1373 = vmatprep.subr.mxu0 0.0
    %1374 = vmatpush1.msra.mxu0 %v1339
    %1375 = vmatprep.subr.mxu0 0.0
    %1376 = vmatpush1.msra.mxu0 %v1338
    %1377 = vmatprep.subr.mxu0 0.0
    %1378 = vmatpush1.msra.mxu0 %v1337
    %1379 = vmatprep.subr.mxu0 0.0
    %1380 = vmatpush1.msra.mxu0 %v1336
    %1381 = vmatprep.subr.mxu0 0.0
    %1382 = vmatpush1.msra.mxu0 %v1335
    %1383 = vmatprep.subr.mxu0 0.0
    %1384 = vmatpush2.msra.mxu0 0.0
    %1385 = vmatprep.subr.mxu0 0.0
    %1386 = vmatpush2.msra.mxu0 0.0
    %1387 = vmatprep.subr.mxu0 0.0
    %1388 = vmatpush2.msra.mxu0 0.0
    %1389 = vmatprep.subr.mxu0 0.0
    %1390 = vmatpush2.msra.mxu0 0.0
    %1391 = vmatprep.subr.mxu0 0.0
    %1392 = vmatpush2.msra.mxu0 0.0
    %1393 = vmatprep.subr.mxu0 0.0
    %1394 = vmatpush2.msra.mxu0 0.0
    %1395 = vmatprep.subr.mxu0 0.0
    %1396 = vmatpush2.msra.mxu0 0.0
    %1397 = vmatprep.subr.mxu0 0.0
    %1398 = vmatpush2.msra.mxu0 0.0
    %1399 = vmatprep.subr.mxu0 0.0
    %1400 = vmatpush2.msra.mxu0 0.0
    %1401 = vmatprep.subr.mxu0 0.0
    %1402 = vmatpush2.msra.mxu0 0.0
    %1403 = vmatprep.subr.mxu0 0.0
    %1404 = vmatpush2.msra.mxu0 0.0
    %1405 = vmatprep.subr.mxu0 0.0
    %1406 = vmatpush2.msra.mxu0 0.0
    %1407 = vmatprep.subr.mxu0 0.0
    %1408 = vmatpush2.msra.mxu0 0.0
    %1409 = vmatprep.subr.mxu0 0.0
    %1410 = vmatpush2.msra.mxu0 0.0
    %1411 = vmatprep.subr.mxu0 0.0
    %1412 = vmatpush2.msra.mxu0 0.0
    %1413 = vmatprep.subr.mxu0 0.0
    %1414 = vmatpush2.msra.mxu0 0.0
    %1415 = vmatprep.mubr.f32.mxu0 0.0
    %1416 = vmatmul.mubr.f32.gmra.mxu0 %v1333
    %v1417 = vpop.f32.mrf.mxu0
    %v1418 = vadd.f32 0.0, %v1417
    %v1419 = vpop.f32.mrf.mxu0
    %1420 = vmatprep.mubr.f32.mxu0 0.0
    %1421 = vmatmul.mubr.f32.gmra.mxu0 %v1334
    %v1422 = vpop.f32.mrf.mxu0
    %v1423 = vadd.f32 0.0, %v1422
    %v1424 = vpop.f32.mrf.mxu0
    %1425 = vdwg.mxu0
    %v1426 = vadd.f32 %v1201, %v1418
    %v1427 = vadd.f32 %v1202, %v1423
    %1428 = vst.msk [vmem:[#allocation7] sm:$0xff] %vm72, %v1426
    %1429 = vst.msk [vmem:[#allocation7 + $0x8] sm:$0xff] %vm72, %v1427
    // Predicated region
    $region54: #{tpu_custom_call.1} parent=1 // pred_check
      _
    $region55: #{tpu_custom_call.1} parent=1 // pred_check_branch
      %1431 = sbr.rel (0) target = $region57
    $region56: #{tpu_custom_call.1} parent=1 // pred_region
      %s1433 = ssub.s32 256, 256
      %1434 = vsyncadd [#allocation4], %s1433
      %s1435 = sshll.u32 [#allocation7], 4
      %s1436 = int_to_ptr.vmem [resolvable:$true] %s1435
      %1441 = dma.vmem_to_hbm [thread:$0]  %s1436, 256, %s11, [#allocation4], 128, 128, 8
    $region57: #{tpu_custom_call.1} parent=1 // pred_fallthru
      _
    // Predicated region
    $region58: #{tpu_custom_call.1} parent=1 // pred_check
      _
    $region59: #{tpu_custom_call.1} parent=1 // pred_check_branch
      %1443 = sbr.rel (0) target = $region61
    $region60: #{tpu_custom_call.1} parent=1 // pred_region
      %1444 = dma.done [#allocation4], 256
    $region61: #{tpu_custom_call.1} parent=1 // pred_fallthru
      _
    %1445 = vsyncpa [#allocation3], 1
    %1446 = vsyncpa [#allocation6], 1
    %1447 = vsyncpa [#allocation4], 1

</llo_original>
